<compile_context>
chip_gen: v5e
topology: v5e:2x2
jax: 0.10.0
libtpu: 0.0.40
codegen_flags: <defaults>
</compile_context>

<pallas_src>
import functools

import jax
import jax.numpy as jnp
from jax.experimental import pallas as pl
from jax.experimental.pallas import tpu as pltpu

NEG_SLOPE = 0.2      # LeakyReLU slope used by GATLayer
MASK_FILL = -1e30    # masked-logit fill for non-edges (finite, f32-representable)


# --------------------------------------------------------------------------------------
# kernels
# --------------------------------------------------------------------------------------
def make_project1_kernel(HC1):
    """Layer-1 fused projection: one MXU call producing [h_lin | att_dst | att_src]."""

    def kernel(x_ref, w1cat_ref, hlin_ref, att1_ref):
        proj = jnp.dot(x_ref[...], w1cat_ref[...],
                       preferred_element_type=jnp.float32)        # (T, HC1 + 2H)
        hlin_ref[...] = proj[:, :HC1].astype(hlin_ref.dtype)       # bf16 hidden features
        att1_ref[...] = proj[:, HC1:]                              # f32 attention terms

    return kernel


def make_attend1_kernel(H, C1):
    """Layer-1 attention + aggregation + ELU for one destination-row tile, fused with the
    layer-2 projection epilogue z2 = h1 @ [W2 | apd2 | aps2]."""

    def kernel(att_dst_ref, att_all_ref, hlin_ref, mask_ref, w2cat_ref, z2_ref):
        a_dst = att_dst_ref[...][:, :H]                            # (T, H) x_i (dst) terms
        a_src_all = jnp.transpose(att_all_ref[...][:, H:])         # (H, N) x_j (src) terms
        mask = mask_ref[...] != 0                                  # (T, N) edge j->i ?
        h_lin = hlin_ref[...]                                      # (N, H*C1) bf16

        outs = []
        # Static unroll over heads; temporaries are (T, N) per head (row-tiled) so live
        # ranges stay bounded. TODO(synk): make `head` a grid axis for very large N.
        for h in range(H):
            e = a_dst[:, h:h + 1] + a_src_all[h:h + 1, :]          # (T, N) logits
            e = jnp.where(e >= 0.0, e, NEG_SLOPE * e)              # leaky_relu
            e = jnp.where(mask, e, MASK_FILL)                      # non-edges -> -1e30
            m = jnp.max(e, axis=1, keepdims=True)
            p = jnp.exp(e - m)                                     # masked entries -> 0
            inv = pl.reciprocal(jnp.sum(p, axis=1, keepdims=True), approx=True)
            alpha = (p * inv).astype(jnp.bfloat16)                 # (T, N)
            # TODO(synk): attention dropout is identity (eval / inference mode)
            out_h = jnp.dot(alpha, h_lin[:, h * C1:(h + 1) * C1],
                            preferred_element_type=jnp.float32)    # (T, C1)
            # ELU epilogue. TODO(synk): expm1 would be marginally more accurate.
            out_h = jnp.where(out_h > 0.0, out_h,
                              jnp.exp(jnp.minimum(out_h, 0.0)) - 1.0)
            outs.append(out_h)

        h1 = jnp.concatenate(outs, axis=1)                         # (T, H*C1) lane-dense
        # TODO(synk): F.dropout between layers is identity (eval / inference mode)
        z2_ref[...] = jnp.dot(h1.astype(jnp.bfloat16), w2cat_ref[...],
                              preferred_element_type=jnp.float32)  # (T, K+2)

    return kernel


def make_attend2_kernel(K):
    """Layer-2 attention + aggregation + log_softmax for one destination-row tile."""

    def kernel(z2_dst_ref, z2_all_ref, mask_ref, out_ref):
        z2_all = z2_all_ref[...]                                   # (N, K+2)
        a_dst = z2_dst_ref[...][:, K:K + 1]                        # (T, 1) dst attn term
        a_src = jnp.transpose(z2_all[:, K + 1:K + 2])              # (1, N) src attn term
        h2 = z2_all[:, :K].astype(jnp.bfloat16)                    # (N, K) projected feats
        mask = mask_ref[...] != 0

        e = a_dst + a_src
        e = jnp.where(e >= 0.0, e, NEG_SLOPE * e)
        e = jnp.where(mask, e, MASK_FILL)
        m = jnp.max(e, axis=1, keepdims=True)
        p = jnp.exp(e - m)
        inv = pl.reciprocal(jnp.sum(p, axis=1, keepdims=True), approx=True)
        alpha = (p * inv).astype(jnp.bfloat16)
        out2 = jnp.dot(alpha, h2, preferred_element_type=jnp.float32)   # (T, K)

        # log_softmax over classes (exact normalization in f32)
        mm = jnp.max(out2, axis=1, keepdims=True)
        z = out2 - mm
        out_ref[...] = z - jnp.log(jnp.sum(jnp.exp(z), axis=1, keepdims=True))

    return kernel


# --------------------------------------------------------------------------------------
# wrapper
# --------------------------------------------------------------------------------------
def _vmem_cap_bytes():
    """Physical per-core VMEM; conservative 64 MiB fallback (fits every generation)."""
    try:
        cap = int(getattr(pltpu.get_tpu_info(), "vmem_capacity_bytes", 0))
        if cap > 0:
            return cap
    except Exception:
        pass
    return 64 << 20


def _pick_row_tile(n, cap_bytes):
    # ~512-row tiles on 128 MiB parts (v5e/v6e), 256 on 64 MiB parts (v7x).
    t = 512 if cap_bytes >= (100 << 20) else 256
    return n if n <= t else t      # small graphs: one full-dim tile (no ragged rows)


@functools.partial(jax.jit, static_argnames=("heads", "hidden", "num_classes",
                                              "row_tile", "vmem_limit"))
def _gatnet_forward_impl(params, x, adj, *, heads, hidden, num_classes,
                         row_tile, vmem_limit):
    N, F = x.shape
    H, C1, K = heads, hidden, num_classes
    HC1 = H * C1
    T = row_tile
    nt = pl.cdiv(N, T)

    # ---------------- parameter folding (wrapper glue, fused by XLA) -------------------
    W1 = params['W1'].astype(jnp.float32)                          # (F, H*C1)
    att1 = params['att1'].astype(jnp.float32)                      # (1, H, 2*C1)
    W1r = W1.reshape(F, H, C1)
    apd1 = jnp.einsum('fhc,hc->fh', W1r, att1[0, :, :C1])          # (F, H) x_i (dst) term
    aps1 = jnp.einsum('fhc,hc->fh', W1r, att1[0, :, C1:])          # (F, H) x_j (src) term
    w1cat = jnp.concatenate([W1, apd1, aps1], axis=1).astype(jnp.bfloat16)  # (F, HC1+2H)

    W2 = params['W2'].astype(jnp.float32)                          # (HC1, K)
    att2 = params['att2'].astype(jnp.float32)                      # (1, 1, 2K)
    apd2 = W2 @ att2[0, 0, :K]                                     # (HC1,)
    aps2 = W2 @ att2[0, 0, K:]                                     # (HC1,)
    w2cat = jnp.concatenate([W2, apd2[:, None], aps2[:, None]],
                            axis=1).astype(jnp.bfloat16)           # (HC1, K+2)

    x_bf16 = x.astype(jnp.bfloat16)
    mask_i8 = (adj > 0).astype(jnp.int8)                           # (N, N) 1 iff edge j->i

    cparams = pltpu.CompilerParams(dimension_semantics=("parallel",),
                                   vmem_limit_bytes=vmem_limit)

    # ---------------- call A: layer-1 projections (row-tiled, pure MXU) ----------------
    h_lin, att1p = pl.pallas_call(
        make_project1_kernel(HC1),
        out_shape=(jax.ShapeDtypeStruct((N, HC1), jnp.bfloat16),
                   jax.ShapeDtypeStruct((N, 2 * H), jnp.float32)),
        grid=(nt,),
        in_specs=[pl.BlockSpec((T, F), lambda i: (i, 0)),
                  pl.BlockSpec((F, HC1 + 2 * H), lambda i: (0, 0))],
        out_specs=(pl.BlockSpec((T, HC1), lambda i: (i, 0)),
                   pl.BlockSpec((T, 2 * H), lambda i: (i, 0))),
        compiler_params=cparams,
    )(x_bf16, w1cat)

    # ---------------- call B: layer-1 attention + ELU + layer-2 projection -------------
    z2 = pl.pallas_call(
        make_attend1_kernel(H, C1),
        out_shape=jax.ShapeDtypeStruct((N, K + 2), jnp.float32),
        grid=(nt,),
        in_specs=[pl.BlockSpec((T, 2 * H), lambda i: (i, 0)),      # dst-tile attn terms
                  pl.BlockSpec((N, 2 * H), lambda i: (0, 0)),      # all-src attn terms
                  pl.BlockSpec((N, HC1), lambda i: (0, 0)),        # all-src hidden (bf16)
                  pl.BlockSpec((T, N), lambda i: (i, 0)),          # int8 edge-mask rows
                  pl.BlockSpec((HC1, K + 2), lambda i: (0, 0))],   # folded layer-2 weights
        out_specs=pl.BlockSpec((T, K + 2), lambda i: (i, 0)),
        compiler_params=cparams,
    )(att1p, att1p, h_lin, mask_i8, w2cat)

    # ---------------- call C: layer-2 attention + log_softmax --------------------------
    out = pl.pallas_call(
        make_attend2_kernel(K),
        out_shape=jax.ShapeDtypeStruct((N, K), jnp.float32),
        grid=(nt,),
        in_specs=[pl.BlockSpec((T, K + 2), lambda i: (i, 0)),
                  pl.BlockSpec((N, K + 2), lambda i: (0, 0)),
                  pl.BlockSpec((T, N), lambda i: (i, 0))],
        out_specs=pl.BlockSpec((T, K), lambda i: (i, 0)),
        compiler_params=cparams,
    )(z2, z2, mask_i8)

    return out                                                      # (N, K) log-probs


def gatnet_forward(params, x, adj, *, heads, hidden, num_classes, row_tile=None):
    """Full GATNet forward: conv1(+ELU), dropout(identity), conv2, log_softmax."""
    cap = _vmem_cap_bytes()
    n = x.shape[0]
    if row_tile is None:
        row_tile = _pick_row_tile(n, cap)
    else:
        row_tile = n if n <= row_tile else ((row_tile + 7) // 8) * 8
    vmem_limit = min(int(cap * 0.85), 110 << 20)
    return _gatnet_forward_impl(params, x, adj, heads=heads, hidden=hidden,
                                num_classes=num_classes, row_tile=row_tile,
                                vmem_limit=vmem_limit)


# --------------------------------------------------------------------------------------
# helpers + demo
# --------------------------------------------------------------------------------------
def build_adj(edge_index, num_nodes):
    """Dense adjacency with self loops; adj[i, j] = 1 iff message j -> i exists."""
    src, dst = edge_index[0], edge_index[1]
    adj = jnp.zeros((num_nodes, num_nodes), jnp.float32)
    adj = adj.at[dst, src].set(1.0)
    diag = jnp.eye(num_nodes, dtype=jnp.float32)                    # add_self_loops
    return jnp.minimum(adj + diag, 1.0)


def xavier_uniform(key, shape):
    if len(shape) == 2:
        fan_in, fan_out = shape[1], shape[0]
    else:
        rf = 1
        for d in shape[2:]:
            rf *= d
        fan_in, fan_out = shape[1] * rf, shape[0] * rf
    bound = (6.0 / (fan_in + fan_out)) ** 0.5
    return jax.random.uniform(key, shape, jnp.float32, -bound, bound)


if __name__ == "__main__":
    num_features, num_classes, hidden, heads = 16, 4, 8, 8
    N = 3

    key = jax.random.PRNGKey(0)
    kx, k1, k2, k3, k4 = jax.random.split(key, 5)

    x = jax.random.normal(kx, (N, num_features), jnp.float32)
    edge_index = jnp.array([[0, 1, 1, 2], [1, 0, 2, 1]], dtype=jnp.int32)
    adj = build_adj(edge_index, N)

    params = {
        'W1':   xavier_uniform(k1, (num_features, heads * hidden)),
        'att1': xavier_uniform(k2, (1, heads, 2 * hidden)),
        'W2':   xavier_uniform(k3, (heads * hidden, num_classes)),
        'att2': xavier_uniform(k4, (1, 1, 2 * num_classes)),
    }

    out = gatnet_forward(params, x, adj,
                         heads=heads, hidden=hidden, num_classes=num_classes)
    out = jax.block_until_ready(out)

    assert out.shape == (N, num_classes), out.shape
    # log_softmax rows should exponentiate to ~1
    row_sums = jnp.sum(jnp.exp(out), axis=1)
    assert bool(jnp.all(jnp.abs(row_sums - 1.0) < 1e-3)), row_sums
    assert bool(jnp.all(jnp.isfinite(out))), out
    print("KERNEL_OK")
</pallas_src>

<mosaic_0001>
module attributes {stable_mosaic.version = 11 : i64} {
  func.func @kernel(%arg0: i32, %arg1: memref<3x16xbf16, #tpu.memory_space<vmem>>, %arg2: memref<16x80xbf16, #tpu.memory_space<vmem>>, %arg3: memref<3x64xbf16, #tpu.memory_space<vmem>>, %arg4: memref<3x16xf32, #tpu.memory_space<vmem>>) attributes {dimension_semantics = [#tpu.dimension_semantics<parallel>], iteration_bounds = array<i64: 1>, scalar_prefetch = 0 : i64, scratch_operands = 0 : i64, tpu.core_type = #tpu.core_type<tc>, window_params = [{transform_indices = @transform_0, window_bounds = array<i64: 3, 16>}, {pipeline_mode = #tpu.pipeline_mode<synchronous>, transform_indices = @transform_1, window_bounds = array<i64: 16, 80>}, {transform_indices = @transform_2, window_bounds = array<i64: 3, 64>}, {transform_indices = @transform_3, window_bounds = array<i64: 3, 16>}]} {
    %c0 = arith.constant 0 : index
    %c0_0 = arith.constant 0 : index
    %0 = vector.load %arg1[%c0, %c0_0] : memref<3x16xbf16, #tpu.memory_space<vmem>>, vector<3x16xbf16>
    %c0_1 = arith.constant 0 : index
    %c0_2 = arith.constant 0 : index
    %1 = vector.load %arg2[%c0_1, %c0_2] : memref<16x80xbf16, #tpu.memory_space<vmem>>, vector<16x80xbf16>
    %cst = arith.constant dense<0.000000e+00> : vector<3x80xf32>
    %2 = tpu.matmul %0, %1, %cst {dimension_numbers = #tpu.dot_dimension_numbers<[1], [0], [0], [1], [0, 0, 1, 1], [], []>} : vector<3x16xbf16>, vector<16x80xbf16>, vector<3x80xf32> -> vector<3x80xf32>
    %3 = vector.extract_strided_slice %2 {offsets = [0, 0], sizes = [3, 64], strides = [1, 1]} : vector<3x80xf32> to vector<3x64xf32>
    %4 = arith.truncf %3 : vector<3x64xf32> to vector<3x64xbf16>
    %c0_3 = arith.constant 0 : index
    %c0_4 = arith.constant 0 : index
    %5 = vector.load %arg3[%c0_3, %c0_4] : memref<3x64xbf16, #tpu.memory_space<vmem>>, vector<3x64xbf16>
    tpu.vector_store %arg3[%c0_3, %c0_4], %4 {strides = array<i32>} : memref<3x64xbf16, #tpu.memory_space<vmem>>, vector<3x64xbf16>,
    %6 = vector.extract_strided_slice %2 {offsets = [0, 64], sizes = [3, 16], strides = [1, 1]} : vector<3x80xf32> to vector<3x16xf32>
    %c0_5 = arith.constant 0 : index
    %c0_6 = arith.constant 0 : index
    %7 = vector.load %arg4[%c0_5, %c0_6] : memref<3x16xf32, #tpu.memory_space<vmem>>, vector<3x16xf32>
    tpu.vector_store %arg4[%c0_5, %c0_6], %6 {strides = array<i32>} : memref<3x16xf32, #tpu.memory_space<vmem>>, vector<3x16xf32>,
    return
  }
  func.func @transform_0(%arg0: i32) -> (i32, i32) {
    %c0_i32 = arith.constant 0 : i32
    %c0_i32_0 = arith.constant 0 : i32
    return %arg0, %c0_i32 : i32, i32
  }
  func.func @transform_1(%arg0: i32) -> (i32, i32) {
    %c0_i32 = arith.constant 0 : i32
    %c0_i32_0 = arith.constant 0 : i32
    %c0_i32_1 = arith.constant 0 : i32
    return %c0_i32, %c0_i32_0 : i32, i32
  }
  func.func @transform_2(%arg0: i32) -> (i32, i32) {
    %c0_i32 = arith.constant 0 : i32
    %c0_i32_0 = arith.constant 0 : i32
    return %arg0, %c0_i32 : i32, i32
  }
  func.func @transform_3(%arg0: i32) -> (i32, i32) {
    %c0_i32 = arith.constant 0 : i32
    %c0_i32_0 = arith.constant 0 : i32
    return %arg0, %c0_i32 : i32, i32
  }
}

module attributes {stable_mosaic.version = 11 : i64} {
  func.func @kernel(%arg0: i32, %arg1: memref<3x6xf32, #tpu.memory_space<vmem>>, %arg2: memref<3x6xf32, #tpu.memory_space<vmem>>, %arg3: memref<3x3xi8, #tpu.memory_space<vmem>>, %arg4: memref<3x4xf32, #tpu.memory_space<vmem>>) attributes {dimension_semantics = [#tpu.dimension_semantics<parallel>], iteration_bounds = array<i64: 1>, scalar_prefetch = 0 : i64, scratch_operands = 0 : i64, tpu.core_type = #tpu.core_type<tc>, window_params = [{transform_indices = @transform_0, window_bounds = array<i64: 3, 6>}, {pipeline_mode = #tpu.pipeline_mode<synchronous>, transform_indices = @transform_1, window_bounds = array<i64: 3, 6>}, {transform_indices = @transform_2, window_bounds = array<i64: 3, 3>}, {transform_indices = @transform_3, window_bounds = array<i64: 3, 4>}]} {
    %c0 = arith.constant 0 : index
    %c0_0 = arith.constant 0 : index
    %0 = vector.load %arg2[%c0, %c0_0] : memref<3x6xf32, #tpu.memory_space<vmem>>, vector<3x6xf32>
    %c0_1 = arith.constant 0 : index
    %c0_2 = arith.constant 0 : index
    %1 = vector.load %arg1[%c0_1, %c0_2] : memref<3x6xf32, #tpu.memory_space<vmem>>, vector<3x6xf32>
    %2 = vector.extract_strided_slice %1 {offsets = [0, 4], sizes = [3, 1], strides = [1, 1]} : vector<3x6xf32> to vector<3x1xf32>
    %3 = vector.extract_strided_slice %0 {offsets = [0, 5], sizes = [3, 1], strides = [1, 1]} : vector<3x6xf32> to vector<3x1xf32>
    %4 = tpu.transpose %3, [1, 0] : vector<3x1xf32> -> vector<1x3xf32>
    %5 = vector.extract_strided_slice %0 {offsets = [0, 0], sizes = [3, 4], strides = [1, 1]} : vector<3x6xf32> to vector<3x4xf32>
    %6 = arith.truncf %5 : vector<3x4xf32> to vector<3x4xbf16>
    %c0_3 = arith.constant 0 : index
    %c0_4 = arith.constant 0 : index
    %7 = vector.load %arg3[%c0_3, %c0_4] : memref<3x3xi8, #tpu.memory_space<vmem>>, vector<3x3xi8>
    %c0_i8 = arith.constant 0 : i8
    %8 = vector.broadcast %c0_i8 : i8 to vector<3x3xi8>
    %9 = arith.cmpi ne, %7, %8 : vector<3x3xi8>
    %10 = vector.broadcast %2 : vector<3x1xf32> to vector<3x3xf32>
    %11 = vector.broadcast %4 : vector<1x3xf32> to vector<3x3xf32>
    %12 = arith.addf %10, %11 : vector<3x3xf32>
    %cst = arith.constant 0.000000e+00 : f32
    %13 = vector.broadcast %cst : f32 to vector<3x3xf32>
    %14 = arith.cmpf oge, %12, %13 : vector<3x3xf32>
    %cst_5 = arith.constant 2.000000e-01 : f32
    %15 = vector.broadcast %cst_5 : f32 to vector<3x3xf32>
    %16 = arith.mulf %15, %12 : vector<3x3xf32>
    %17 = arith.select %14, %12, %16 : vector<3x3xi1>, vector<3x3xf32>
    %cst_6 = arith.constant -1.000000e+30 : f32
    %18 = vector.broadcast %cst_6 : f32 to vector<3x3xf32>
    %19 = arith.select %9, %17, %18 : vector<3x3xi1>, vector<3x3xf32>
    %cst_7 = arith.constant dense<0xFF800000> : vector<3xf32>
    %20 = vector.multi_reduction <maximumf>, %19, %cst_7 [1] : vector<3x3xf32> to vector<3xf32>
    %21 = vector.shape_cast %20 : vector<3xf32> to vector<3x1xf32>
    %22 = vector.broadcast %21 : vector<3x1xf32> to vector<3x3xf32>
    %23 = arith.subf %19, %22 : vector<3x3xf32>
    %24 = math.exp %23 : vector<3x3xf32>
    %cst_8 = arith.constant dense<0.000000e+00> : vector<3xf32>
    %25 = vector.multi_reduction <add>, %24, %cst_8 [1] : vector<3x3xf32> to vector<3xf32>
    %26 = vector.shape_cast %25 : vector<3xf32> to vector<3x1xf32>
    %27 = tpu.reciprocal %26 {approx = true} : vector<3x1xf32> -> vector<3x1xf32>
    %28 = vector.broadcast %27 : vector<3x1xf32> to vector<3x3xf32>
    %29 = arith.mulf %24, %28 : vector<3x3xf32>
    %30 = arith.truncf %29 : vector<3x3xf32> to vector<3x3xbf16>
    %cst_9 = arith.constant dense<0.000000e+00> : vector<3x4xf32>
    %31 = tpu.matmul %30, %6, %cst_9 {dimension_numbers = #tpu.dot_dimension_numbers<[1], [0], [0], [1], [0, 0, 1, 1], [], []>} : vector<3x3xbf16>, vector<3x4xbf16>, vector<3x4xf32> -> vector<3x4xf32>
    %cst_10 = arith.constant dense<0xFF800000> : vector<3xf32>
    %32 = vector.multi_reduction <maximumf>, %31, %cst_10 [1] : vector<3x4xf32> to vector<3xf32>
    %33 = vector.shape_cast %32 : vector<3xf32> to vector<3x1xf32>
    %34 = vector.broadcast %33 : vector<3x1xf32> to vector<3x4xf32>
    %35 = arith.subf %31, %34 : vector<3x4xf32>
    %36 = math.exp %35 : vector<3x4xf32>
    %cst_11 = arith.constant dense<0.000000e+00> : vector<3xf32>
    %37 = vector.multi_reduction <add>, %36, %cst_11 [1] : vector<3x4xf32> to vector<3xf32>
    %38 = vector.shape_cast %37 : vector<3xf32> to vector<3x1xf32>
    %39 = math.log %38 : vector<3x1xf32>
    %40 = vector.broadcast %39 : vector<3x1xf32> to vector<3x4xf32>
    %41 = arith.subf %35, %40 : vector<3x4xf32>
    %c0_12 = arith.constant 0 : index
    %c0_13 = arith.constant 0 : index
    %42 = vector.load %arg4[%c0_12, %c0_13] : memref<3x4xf32, #tpu.memory_space<vmem>>, vector<3x4xf32>
    tpu.vector_store %arg4[%c0_12, %c0_13], %41 {strides = array<i32>} : memref<3x4xf32, #tpu.memory_space<vmem>>, vector<3x4xf32>,
    return
  }
  func.func @transform_0(%arg0: i32) -> (i32, i32) {
    %c0_i32 = arith.constant 0 : i32
    %c0_i32_0 = arith.constant 0 : i32
    return %arg0, %c0_i32 : i32, i32
  }
  func.func @transform_1(%arg0: i32) -> (i32, i32) {
    %c0_i32 = arith.constant 0 : i32
    %c0_i32_0 = arith.constant 0 : i32
    %c0_i32_1 = arith.constant 0 : i32
    return %c0_i32, %c0_i32_0 : i32, i32
  }
  func.func @transform_2(%arg0: i32) -> (i32, i32) {
    %c0_i32 = arith.constant 0 : i32
    %c0_i32_0 = arith.constant 0 : i32
    return %arg0, %c0_i32 : i32, i32
  }
  func.func @transform_3(%arg0: i32) -> (i32, i32) {
    %c0_i32 = arith.constant 0 : i32
    %c0_i32_0 = arith.constant 0 : i32
    return %arg0, %c0_i32 : i32, i32
  }
}

module attributes {stable_mosaic.version = 11 : i64} {
  func.func @kernel(%arg0: i32, %arg1: memref<3x16xf32, #tpu.memory_space<vmem>>, %arg2: memref<3x16xf32, #tpu.memory_space<vmem>>, %arg3: memref<3x64xbf16, #tpu.memory_space<vmem>>, %arg4: memref<3x3xi8, #tpu.memory_space<vmem>>, %arg5: memref<64x6xbf16, #tpu.memory_space<vmem>>, %arg6: memref<3x6xf32, #tpu.memory_space<vmem>>) attributes {dimension_semantics = [#tpu.dimension_semantics<parallel>], iteration_bounds = array<i64: 1>, scalar_prefetch = 0 : i64, scratch_operands = 0 : i64, tpu.core_type = #tpu.core_type<tc>, window_params = [{transform_indices = @transform_0, window_bounds = array<i64: 3, 16>}, {pipeline_mode = #tpu.pipeline_mode<synchronous>, transform_indices = @transform_1, window_bounds = array<i64: 3, 16>}, {pipeline_mode = #tpu.pipeline_mode<synchronous>, transform_indices = @transform_2, window_bounds = array<i64: 3, 64>}, {transform_indices = @transform_3, window_bounds = array<i64: 3, 3>}, {pipeline_mode = #tpu.pipeline_mode<synchronous>, transform_indices = @transform_4, window_bounds = array<i64: 64, 6>}, {transform_indices = @transform_5, window_bounds = array<i64: 3, 6>}]} {
    %c0 = arith.constant 0 : index
    %c0_0 = arith.constant 0 : index
    %0 = vector.load %arg1[%c0, %c0_0] : memref<3x16xf32, #tpu.memory_space<vmem>>, vector<3x16xf32>
    %1 = vector.extract_strided_slice %0 {offsets = [0, 0], sizes = [3, 8], strides = [1, 1]} : vector<3x16xf32> to vector<3x8xf32>
    %c0_1 = arith.constant 0 : index
    %c0_2 = arith.constant 0 : index
    %2 = vector.load %arg2[%c0_1, %c0_2] : memref<3x16xf32, #tpu.memory_space<vmem>>, vector<3x16xf32>
    %3 = vector.extract_strided_slice %2 {offsets = [0, 8], sizes = [3, 8], strides = [1, 1]} : vector<3x16xf32> to vector<3x8xf32>
    %4 = tpu.transpose %3, [1, 0] : vector<3x8xf32> -> vector<8x3xf32>
    %c0_3 = arith.constant 0 : index
    %c0_4 = arith.constant 0 : index
    %5 = vector.load %arg4[%c0_3, %c0_4] : memref<3x3xi8, #tpu.memory_space<vmem>>, vector<3x3xi8>
    %c0_i8 = arith.constant 0 : i8
    %6 = vector.broadcast %c0_i8 : i8 to vector<3x3xi8>
    %7 = arith.cmpi ne, %5, %6 : vector<3x3xi8>
    %c0_5 = arith.constant 0 : index
    %c0_6 = arith.constant 0 : index
    %8 = vector.load %arg3[%c0_5, %c0_6] : memref<3x64xbf16, #tpu.memory_space<vmem>>, vector<3x64xbf16>
    %9 = vector.extract_strided_slice %1 {offsets = [0, 0], sizes = [3, 1], strides = [1, 1]} : vector<3x8xf32> to vector<3x1xf32>
    %10 = vector.extract_strided_slice %4 {offsets = [0, 0], sizes = [1, 3], strides = [1, 1]} : vector<8x3xf32> to vector<1x3xf32>
    %11 = vector.broadcast %9 : vector<3x1xf32> to vector<3x3xf32>
    %12 = vector.broadcast %10 : vector<1x3xf32> to vector<3x3xf32>
    %13 = arith.addf %11, %12 : vector<3x3xf32>
    %cst = arith.constant 0.000000e+00 : f32
    %14 = vector.broadcast %cst : f32 to vector<3x3xf32>
    %15 = arith.cmpf oge, %13, %14 : vector<3x3xf32>
    %cst_7 = arith.constant 2.000000e-01 : f32
    %16 = vector.broadcast %cst_7 : f32 to vector<3x3xf32>
    %17 = arith.mulf %16, %13 : vector<3x3xf32>
    %18 = arith.select %15, %13, %17 : vector<3x3xi1>, vector<3x3xf32>
    %cst_8 = arith.constant -1.000000e+30 : f32
    %19 = vector.broadcast %cst_8 : f32 to vector<3x3xf32>
    %20 = arith.select %7, %18, %19 : vector<3x3xi1>, vector<3x3xf32>
    %cst_9 = arith.constant dense<0xFF800000> : vector<3xf32>
    %21 = vector.multi_reduction <maximumf>, %20, %cst_9 [1] : vector<3x3xf32> to vector<3xf32>
    %22 = vector.shape_cast %21 : vector<3xf32> to vector<3x1xf32>
    %23 = vector.broadcast %22 : vector<3x1xf32> to vector<3x3xf32>
    %24 = arith.subf %20, %23 : vector<3x3xf32>
    %25 = math.exp %24 : vector<3x3xf32>
    %cst_10 = arith.constant dense<0.000000e+00> : vector<3xf32>
    %26 = vector.multi_reduction <add>, %25, %cst_10 [1] : vector<3x3xf32> to vector<3xf32>
    %27 = vector.shape_cast %26 : vector<3xf32> to vector<3x1xf32>
    %28 = tpu.reciprocal %27 {approx = true} : vector<3x1xf32> -> vector<3x1xf32>
    %29 = vector.broadcast %28 : vector<3x1xf32> to vector<3x3xf32>
    %30 = arith.mulf %25, %29 : vector<3x3xf32>
    %31 = arith.truncf %30 : vector<3x3xf32> to vector<3x3xbf16>
    %32 = vector.extract_strided_slice %8 {offsets = [0, 0], sizes = [3, 8], strides = [1, 1]} : vector<3x64xbf16> to vector<3x8xbf16>
    %cst_11 = arith.constant dense<0.000000e+00> : vector<3x8xf32>
    %33 = tpu.matmul %31, %32, %cst_11 {dimension_numbers = #tpu.dot_dimension_numbers<[1], [0], [0], [1], [0, 0, 1, 1], [], []>} : vector<3x3xbf16>, vector<3x8xbf16>, vector<3x8xf32> -> vector<3x8xf32>
    %cst_12 = arith.constant 0.000000e+00 : f32
    %34 = vector.broadcast %cst_12 : f32 to vector<3x8xf32>
    %35 = arith.cmpf ogt, %33, %34 : vector<3x8xf32>
    %cst_13 = arith.constant 0.000000e+00 : f32
    %36 = vector.broadcast %cst_13 : f32 to vector<3x8xf32>
    %37 = arith.minimumf %33, %36 : vector<3x8xf32>
    %38 = math.exp %37 : vector<3x8xf32>
    %cst_14 = arith.constant 1.000000e+00 : f32
    %39 = vector.broadcast %cst_14 : f32 to vector<3x8xf32>
    %40 = arith.subf %38, %39 : vector<3x8xf32>
    %41 = arith.select %35, %33, %40 : vector<3x8xi1>, vector<3x8xf32>
    %42 = vector.extract_strided_slice %1 {offsets = [0, 1], sizes = [3, 1], strides = [1, 1]} : vector<3x8xf32> to vector<3x1xf32>
    %43 = vector.extract_strided_slice %4 {offsets = [1, 0], sizes = [1, 3], strides = [1, 1]} : vector<8x3xf32> to vector<1x3xf32>
    %44 = vector.broadcast %42 : vector<3x1xf32> to vector<3x3xf32>
    %45 = vector.broadcast %43 : vector<1x3xf32> to vector<3x3xf32>
    %46 = arith.addf %44, %45 : vector<3x3xf32>
    %cst_15 = arith.constant 0.000000e+00 : f32
    %47 = vector.broadcast %cst_15 : f32 to vector<3x3xf32>
    %48 = arith.cmpf oge, %46, %47 : vector<3x3xf32>
    %cst_16 = arith.constant 2.000000e-01 : f32
    %49 = vector.broadcast %cst_16 : f32 to vector<3x3xf32>
    %50 = arith.mulf %49, %46 : vector<3x3xf32>
    %51 = arith.select %48, %46, %50 : vector<3x3xi1>, vector<3x3xf32>
    %cst_17 = arith.constant -1.000000e+30 : f32
    %52 = vector.broadcast %cst_17 : f32 to vector<3x3xf32>
    %53 = arith.select %7, %51, %52 : vector<3x3xi1>, vector<3x3xf32>
    %cst_18 = arith.constant dense<0xFF800000> : vector<3xf32>
    %54 = vector.multi_reduction <maximumf>, %53, %cst_18 [1] : vector<3x3xf32> to vector<3xf32>
    %55 = vector.shape_cast %54 : vector<3xf32> to vector<3x1xf32>
    %56 = vector.broadcast %55 : vector<3x1xf32> to vector<3x3xf32>
    %57 = arith.subf %53, %56 : vector<3x3xf32>
    %58 = math.exp %57 : vector<3x3xf32>
    %cst_19 = arith.constant dense<0.000000e+00> : vector<3xf32>
    %59 = vector.multi_reduction <add>, %58, %cst_19 [1] : vector<3x3xf32> to vector<3xf32>
    %60 = vector.shape_cast %59 : vector<3xf32> to vector<3x1xf32>
    %61 = tpu.reciprocal %60 {approx = true} : vector<3x1xf32> -> vector<3x1xf32>
    %62 = vector.broadcast %61 : vector<3x1xf32> to vector<3x3xf32>
    %63 = arith.mulf %58, %62 : vector<3x3xf32>
    %64 = arith.truncf %63 : vector<3x3xf32> to vector<3x3xbf16>
    %65 = vector.extract_strided_slice %8 {offsets = [0, 8], sizes = [3, 8], strides = [1, 1]} : vector<3x64xbf16> to vector<3x8xbf16>
    %cst_20 = arith.constant dense<0.000000e+00> : vector<3x8xf32>
    %66 = tpu.matmul %64, %65, %cst_20 {dimension_numbers = #tpu.dot_dimension_numbers<[1], [0], [0], [1], [0, 0, 1, 1], [], []>} : vector<3x3xbf16>, vector<3x8xbf16>, vector<3x8xf32> -> vector<3x8xf32>
    %cst_21 = arith.constant 0.000000e+00 : f32
    %67 = vector.broadcast %cst_21 : f32 to vector<3x8xf32>
    %68 = arith.cmpf ogt, %66, %67 : vector<3x8xf32>
    %cst_22 = arith.constant 0.000000e+00 : f32
    %69 = vector.broadcast %cst_22 : f32 to vector<3x8xf32>
    %70 = arith.minimumf %66, %69 : vector<3x8xf32>
    %71 = math.exp %70 : vector<3x8xf32>
    %cst_23 = arith.constant 1.000000e+00 : f32
    %72 = vector.broadcast %cst_23 : f32 to vector<3x8xf32>
    %73 = arith.subf %71, %72 : vector<3x8xf32>
    %74 = arith.select %68, %66, %73 : vector<3x8xi1>, vector<3x8xf32>
    %75 = vector.extract_strided_slice %1 {offsets = [0, 2], sizes = [3, 1], strides = [1, 1]} : vector<3x8xf32> to vector<3x1xf32>
    %76 = vector.extract_strided_slice %4 {offsets = [2, 0], sizes = [1, 3], strides = [1, 1]} : vector<8x3xf32> to vector<1x3xf32>
    %77 = vector.broadcast %75 : vector<3x1xf32> to vector<3x3xf32>
    %78 = vector.broadcast %76 : vector<1x3xf32> to vector<3x3xf32>
    %79 = arith.addf %77, %78 : vector<3x3xf32>
    %cst_24 = arith.constant 0.000000e+00 : f32
    %80 = vector.broadcast %cst_24 : f32 to vector<3x3xf32>
    %81 = arith.cmpf oge, %79, %80 : vector<3x3xf32>
    %cst_25 = arith.constant 2.000000e-01 : f32
    %82 = vector.broadcast %cst_25 : f32 to vector<3x3xf32>
    %83 = arith.mulf %82, %79 : vector<3x3xf32>
    %84 = arith.select %81, %79, %83 : vector<3x3xi1>, vector<3x3xf32>
    %cst_26 = arith.constant -1.000000e+30 : f32
    %85 = vector.broadcast %cst_26 : f32 to vector<3x3xf32>
    %86 = arith.select %7, %84, %85 : vector<3x3xi1>, vector<3x3xf32>
    %cst_27 = arith.constant dense<0xFF800000> : vector<3xf32>
    %87 = vector.multi_reduction <maximumf>, %86, %cst_27 [1] : vector<3x3xf32> to vector<3xf32>
    %88 = vector.shape_cast %87 : vector<3xf32> to vector<3x1xf32>
    %89 = vector.broadcast %88 : vector<3x1xf32> to vector<3x3xf32>
    %90 = arith.subf %86, %89 : vector<3x3xf32>
    %91 = math.exp %90 : vector<3x3xf32>
    %cst_28 = arith.constant dense<0.000000e+00> : vector<3xf32>
    %92 = vector.multi_reduction <add>, %91, %cst_28 [1] : vector<3x3xf32> to vector<3xf32>
    %93 = vector.shape_cast %92 : vector<3xf32> to vector<3x1xf32>
    %94 = tpu.reciprocal %93 {approx = true} : vector<3x1xf32> -> vector<3x1xf32>
    %95 = vector.broadcast %94 : vector<3x1xf32> to vector<3x3xf32>
    %96 = arith.mulf %91, %95 : vector<3x3xf32>
    %97 = arith.truncf %96 : vector<3x3xf32> to vector<3x3xbf16>
    %98 = vector.extract_strided_slice %8 {offsets = [0, 16], sizes = [3, 8], strides = [1, 1]} : vector<3x64xbf16> to vector<3x8xbf16>
    %cst_29 = arith.constant dense<0.000000e+00> : vector<3x8xf32>
    %99 = tpu.matmul %97, %98, %cst_29 {dimension_numbers = #tpu.dot_dimension_numbers<[1], [0], [0], [1], [0, 0, 1, 1], [], []>} : vector<3x3xbf16>, vector<3x8xbf16>, vector<3x8xf32> -> vector<3x8xf32>
    %cst_30 = arith.constant 0.000000e+00 : f32
    %100 = vector.broadcast %cst_30 : f32 to vector<3x8xf32>
    %101 = arith.cmpf ogt, %99, %100 : vector<3x8xf32>
    %cst_31 = arith.constant 0.000000e+00 : f32
    %102 = vector.broadcast %cst_31 : f32 to vector<3x8xf32>
    %103 = arith.minimumf %99, %102 : vector<3x8xf32>
    %104 = math.exp %103 : vector<3x8xf32>
    %cst_32 = arith.constant 1.000000e+00 : f32
    %105 = vector.broadcast %cst_32 : f32 to vector<3x8xf32>
    %106 = arith.subf %104, %105 : vector<3x8xf32>
    %107 = arith.select %101, %99, %106 : vector<3x8xi1>, vector<3x8xf32>
    %108 = vector.extract_strided_slice %1 {offsets = [0, 3], sizes = [3, 1], strides = [1, 1]} : vector<3x8xf32> to vector<3x1xf32>
    %109 = vector.extract_strided_slice %4 {offsets = [3, 0], sizes = [1, 3], strides = [1, 1]} : vector<8x3xf32> to vector<1x3xf32>
    %110 = vector.broadcast %108 : vector<3x1xf32> to vector<3x3xf32>
    %111 = vector.broadcast %109 : vector<1x3xf32> to vector<3x3xf32>
    %112 = arith.addf %110, %111 : vector<3x3xf32>
    %cst_33 = arith.constant 0.000000e+00 : f32
    %113 = vector.broadcast %cst_33 : f32 to vector<3x3xf32>
    %114 = arith.cmpf oge, %112, %113 : vector<3x3xf32>
    %cst_34 = arith.constant 2.000000e-01 : f32
    %115 = vector.broadcast %cst_34 : f32 to vector<3x3xf32>
    %116 = arith.mulf %115, %112 : vector<3x3xf32>
    %117 = arith.select %114, %112, %116 : vector<3x3xi1>, vector<3x3xf32>
    %cst_35 = arith.constant -1.000000e+30 : f32
    %118 = vector.broadcast %cst_35 : f32 to vector<3x3xf32>
    %119 = arith.select %7, %117, %118 : vector<3x3xi1>, vector<3x3xf32>
    %cst_36 = arith.constant dense<0xFF800000> : vector<3xf32>
    %120 = vector.multi_reduction <maximumf>, %119, %cst_36 [1] : vector<3x3xf32> to vector<3xf32>
    %121 = vector.shape_cast %120 : vector<3xf32> to vector<3x1xf32>
    %122 = vector.broadcast %121 : vector<3x1xf32> to vector<3x3xf32>
    %123 = arith.subf %119, %122 : vector<3x3xf32>
    %124 = math.exp %123 : vector<3x3xf32>
    %cst_37 = arith.constant dense<0.000000e+00> : vector<3xf32>
    %125 = vector.multi_reduction <add>, %124, %cst_37 [1] : vector<3x3xf32> to vector<3xf32>
    %126 = vector.shape_cast %125 : vector<3xf32> to vector<3x1xf32>
    %127 = tpu.reciprocal %126 {approx = true} : vector<3x1xf32> -> vector<3x1xf32>
    %128 = vector.broadcast %127 : vector<3x1xf32> to vector<3x3xf32>
    %129 = arith.mulf %124, %128 : vector<3x3xf32>
    %130 = arith.truncf %129 : vector<3x3xf32> to vector<3x3xbf16>
    %131 = vector.extract_strided_slice %8 {offsets = [0, 24], sizes = [3, 8], strides = [1, 1]} : vector<3x64xbf16> to vector<3x8xbf16>
    %cst_38 = arith.constant dense<0.000000e+00> : vector<3x8xf32>
    %132 = tpu.matmul %130, %131, %cst_38 {dimension_numbers = #tpu.dot_dimension_numbers<[1], [0], [0], [1], [0, 0, 1, 1], [], []>} : vector<3x3xbf16>, vector<3x8xbf16>, vector<3x8xf32> -> vector<3x8xf32>
    %cst_39 = arith.constant 0.000000e+00 : f32
    %133 = vector.broadcast %cst_39 : f32 to vector<3x8xf32>
    %134 = arith.cmpf ogt, %132, %133 : vector<3x8xf32>
    %cst_40 = arith.constant 0.000000e+00 : f32
    %135 = vector.broadcast %cst_40 : f32 to vector<3x8xf32>
    %136 = arith.minimumf %132, %135 : vector<3x8xf32>
    %137 = math.exp %136 : vector<3x8xf32>
    %cst_41 = arith.constant 1.000000e+00 : f32
    %138 = vector.broadcast %cst_41 : f32 to vector<3x8xf32>
    %139 = arith.subf %137, %138 : vector<3x8xf32>
    %140 = arith.select %134, %132, %139 : vector<3x8xi1>, vector<3x8xf32>
    %141 = vector.extract_strided_slice %1 {offsets = [0, 4], sizes = [3, 1], strides = [1, 1]} : vector<3x8xf32> to vector<3x1xf32>
    %142 = vector.extract_strided_slice %4 {offsets = [4, 0], sizes = [1, 3], strides = [1, 1]} : vector<8x3xf32> to vector<1x3xf32>
    %143 = vector.broadcast %141 : vector<3x1xf32> to vector<3x3xf32>
    %144 = vector.broadcast %142 : vector<1x3xf32> to vector<3x3xf32>
    %145 = arith.addf %143, %144 : vector<3x3xf32>
    %cst_42 = arith.constant 0.000000e+00 : f32
    %146 = vector.broadcast %cst_42 : f32 to vector<3x3xf32>
    %147 = arith.cmpf oge, %145, %146 : vector<3x3xf32>
    %cst_43 = arith.constant 2.000000e-01 : f32
    %148 = vector.broadcast %cst_43 : f32 to vector<3x3xf32>
    %149 = arith.mulf %148, %145 : vector<3x3xf32>
    %150 = arith.select %147, %145, %149 : vector<3x3xi1>, vector<3x3xf32>
    %cst_44 = arith.constant -1.000000e+30 : f32
    %151 = vector.broadcast %cst_44 : f32 to vector<3x3xf32>
    %152 = arith.select %7, %150, %151 : vector<3x3xi1>, vector<3x3xf32>
    %cst_45 = arith.constant dense<0xFF800000> : vector<3xf32>
    %153 = vector.multi_reduction <maximumf>, %152, %cst_45 [1] : vector<3x3xf32> to vector<3xf32>
    %154 = vector.shape_cast %153 : vector<3xf32> to vector<3x1xf32>
    %155 = vector.broadcast %154 : vector<3x1xf32> to vector<3x3xf32>
    %156 = arith.subf %152, %155 : vector<3x3xf32>
    %157 = math.exp %156 : vector<3x3xf32>
    %cst_46 = arith.constant dense<0.000000e+00> : vector<3xf32>
    %158 = vector.multi_reduction <add>, %157, %cst_46 [1] : vector<3x3xf32> to vector<3xf32>
    %159 = vector.shape_cast %158 : vector<3xf32> to vector<3x1xf32>
    %160 = tpu.reciprocal %159 {approx = true} : vector<3x1xf32> -> vector<3x1xf32>
    %161 = vector.broadcast %160 : vector<3x1xf32> to vector<3x3xf32>
    %162 = arith.mulf %157, %161 : vector<3x3xf32>
    %163 = arith.truncf %162 : vector<3x3xf32> to vector<3x3xbf16>
    %164 = vector.extract_strided_slice %8 {offsets = [0, 32], sizes = [3, 8], strides = [1, 1]} : vector<3x64xbf16> to vector<3x8xbf16>
    %cst_47 = arith.constant dense<0.000000e+00> : vector<3x8xf32>
    %165 = tpu.matmul %163, %164, %cst_47 {dimension_numbers = #tpu.dot_dimension_numbers<[1], [0], [0], [1], [0, 0, 1, 1], [], []>} : vector<3x3xbf16>, vector<3x8xbf16>, vector<3x8xf32> -> vector<3x8xf32>
    %cst_48 = arith.constant 0.000000e+00 : f32
    %166 = vector.broadcast %cst_48 : f32 to vector<3x8xf32>
    %167 = arith.cmpf ogt, %165, %166 : vector<3x8xf32>
    %cst_49 = arith.constant 0.000000e+00 : f32
    %168 = vector.broadcast %cst_49 : f32 to vector<3x8xf32>
    %169 = arith.minimumf %165, %168 : vector<3x8xf32>
    %170 = math.exp %169 : vector<3x8xf32>
    %cst_50 = arith.constant 1.000000e+00 : f32
    %171 = vector.broadcast %cst_50 : f32 to vector<3x8xf32>
    %172 = arith.subf %170, %171 : vector<3x8xf32>
    %173 = arith.select %167, %165, %172 : vector<3x8xi1>, vector<3x8xf32>
    %174 = vector.extract_strided_slice %1 {offsets = [0, 5], sizes = [3, 1], strides = [1, 1]} : vector<3x8xf32> to vector<3x1xf32>
    %175 = vector.extract_strided_slice %4 {offsets = [5, 0], sizes = [1, 3], strides = [1, 1]} : vector<8x3xf32> to vector<1x3xf32>
    %176 = vector.broadcast %174 : vector<3x1xf32> to vector<3x3xf32>
    %177 = vector.broadcast %175 : vector<1x3xf32> to vector<3x3xf32>
    %178 = arith.addf %176, %177 : vector<3x3xf32>
    %cst_51 = arith.constant 0.000000e+00 : f32
    %179 = vector.broadcast %cst_51 : f32 to vector<3x3xf32>
    %180 = arith.cmpf oge, %178, %179 : vector<3x3xf32>
    %cst_52 = arith.constant 2.000000e-01 : f32
    %181 = vector.broadcast %cst_52 : f32 to vector<3x3xf32>
    %182 = arith.mulf %181, %178 : vector<3x3xf32>
    %183 = arith.select %180, %178, %182 : vector<3x3xi1>, vector<3x3xf32>
    %cst_53 = arith.constant -1.000000e+30 : f32
    %184 = vector.broadcast %cst_53 : f32 to vector<3x3xf32>
    %185 = arith.select %7, %183, %184 : vector<3x3xi1>, vector<3x3xf32>
    %cst_54 = arith.constant dense<0xFF800000> : vector<3xf32>
    %186 = vector.multi_reduction <maximumf>, %185, %cst_54 [1] : vector<3x3xf32> to vector<3xf32>
    %187 = vector.shape_cast %186 : vector<3xf32> to vector<3x1xf32>
    %188 = vector.broadcast %187 : vector<3x1xf32> to vector<3x3xf32>
    %189 = arith.subf %185, %188 : vector<3x3xf32>
    %190 = math.exp %189 : vector<3x3xf32>
    %cst_55 = arith.constant dense<0.000000e+00> : vector<3xf32>
    %191 = vector.multi_reduction <add>, %190, %cst_55 [1] : vector<3x3xf32> to vector<3xf32>
    %192 = vector.shape_cast %191 : vector<3xf32> to vector<3x1xf32>
    %193 = tpu.reciprocal %192 {approx = true} : vector<3x1xf32> -> vector<3x1xf32>
    %194 = vector.broadcast %193 : vector<3x1xf32> to vector<3x3xf32>
    %195 = arith.mulf %190, %194 : vector<3x3xf32>
    %196 = arith.truncf %195 : vector<3x3xf32> to vector<3x3xbf16>
    %197 = vector.extract_strided_slice %8 {offsets = [0, 40], sizes = [3, 8], strides = [1, 1]} : vector<3x64xbf16> to vector<3x8xbf16>
    %cst_56 = arith.constant dense<0.000000e+00> : vector<3x8xf32>
    %198 = tpu.matmul %196, %197, %cst_56 {dimension_numbers = #tpu.dot_dimension_numbers<[1], [0], [0], [1], [0, 0, 1, 1], [], []>} : vector<3x3xbf16>, vector<3x8xbf16>, vector<3x8xf32> -> vector<3x8xf32>
    %cst_57 = arith.constant 0.000000e+00 : f32
    %199 = vector.broadcast %cst_57 : f32 to vector<3x8xf32>
    %200 = arith.cmpf ogt, %198, %199 : vector<3x8xf32>
    %cst_58 = arith.constant 0.000000e+00 : f32
    %201 = vector.broadcast %cst_58 : f32 to vector<3x8xf32>
    %202 = arith.minimumf %198, %201 : vector<3x8xf32>
    %203 = math.exp %202 : vector<3x8xf32>
    %cst_59 = arith.constant 1.000000e+00 : f32
    %204 = vector.broadcast %cst_59 : f32 to vector<3x8xf32>
    %205 = arith.subf %203, %204 : vector<3x8xf32>
    %206 = arith.select %200, %198, %205 : vector<3x8xi1>, vector<3x8xf32>
    %207 = vector.extract_strided_slice %1 {offsets = [0, 6], sizes = [3, 1], strides = [1, 1]} : vector<3x8xf32> to vector<3x1xf32>
    %208 = vector.extract_strided_slice %4 {offsets = [6, 0], sizes = [1, 3], strides = [1, 1]} : vector<8x3xf32> to vector<1x3xf32>
    %209 = vector.broadcast %207 : vector<3x1xf32> to vector<3x3xf32>
    %210 = vector.broadcast %208 : vector<1x3xf32> to vector<3x3xf32>
    %211 = arith.addf %209, %210 : vector<3x3xf32>
    %cst_60 = arith.constant 0.000000e+00 : f32
    %212 = vector.broadcast %cst_60 : f32 to vector<3x3xf32>
    %213 = arith.cmpf oge, %211, %212 : vector<3x3xf32>
    %cst_61 = arith.constant 2.000000e-01 : f32
    %214 = vector.broadcast %cst_61 : f32 to vector<3x3xf32>
    %215 = arith.mulf %214, %211 : vector<3x3xf32>
    %216 = arith.select %213, %211, %215 : vector<3x3xi1>, vector<3x3xf32>
    %cst_62 = arith.constant -1.000000e+30 : f32
    %217 = vector.broadcast %cst_62 : f32 to vector<3x3xf32>
    %218 = arith.select %7, %216, %217 : vector<3x3xi1>, vector<3x3xf32>
    %cst_63 = arith.constant dense<0xFF800000> : vector<3xf32>
    %219 = vector.multi_reduction <maximumf>, %218, %cst_63 [1] : vector<3x3xf32> to vector<3xf32>
    %220 = vector.shape_cast %219 : vector<3xf32> to vector<3x1xf32>
    %221 = vector.broadcast %220 : vector<3x1xf32> to vector<3x3xf32>
    %222 = arith.subf %218, %221 : vector<3x3xf32>
    %223 = math.exp %222 : vector<3x3xf32>
    %cst_64 = arith.constant dense<0.000000e+00> : vector<3xf32>
    %224 = vector.multi_reduction <add>, %223, %cst_64 [1] : vector<3x3xf32> to vector<3xf32>
    %225 = vector.shape_cast %224 : vector<3xf32> to vector<3x1xf32>
    %226 = tpu.reciprocal %225 {approx = true} : vector<3x1xf32> -> vector<3x1xf32>
    %227 = vector.broadcast %226 : vector<3x1xf32> to vector<3x3xf32>
    %228 = arith.mulf %223, %227 : vector<3x3xf32>
    %229 = arith.truncf %228 : vector<3x3xf32> to vector<3x3xbf16>
    %230 = vector.extract_strided_slice %8 {offsets = [0, 48], sizes = [3, 8], strides = [1, 1]} : vector<3x64xbf16> to vector<3x8xbf16>
    %cst_65 = arith.constant dense<0.000000e+00> : vector<3x8xf32>
    %231 = tpu.matmul %229, %230, %cst_65 {dimension_numbers = #tpu.dot_dimension_numbers<[1], [0], [0], [1], [0, 0, 1, 1], [], []>} : vector<3x3xbf16>, vector<3x8xbf16>, vector<3x8xf32> -> vector<3x8xf32>
    %cst_66 = arith.constant 0.000000e+00 : f32
    %232 = vector.broadcast %cst_66 : f32 to vector<3x8xf32>
    %233 = arith.cmpf ogt, %231, %232 : vector<3x8xf32>
    %cst_67 = arith.constant 0.000000e+00 : f32
    %234 = vector.broadcast %cst_67 : f32 to vector<3x8xf32>
    %235 = arith.minimumf %231, %234 : vector<3x8xf32>
    %236 = math.exp %235 : vector<3x8xf32>
    %cst_68 = arith.constant 1.000000e+00 : f32
    %237 = vector.broadcast %cst_68 : f32 to vector<3x8xf32>
    %238 = arith.subf %236, %237 : vector<3x8xf32>
    %239 = arith.select %233, %231, %238 : vector<3x8xi1>, vector<3x8xf32>
    %240 = vector.extract_strided_slice %1 {offsets = [0, 7], sizes = [3, 1], strides = [1, 1]} : vector<3x8xf32> to vector<3x1xf32>
    %241 = vector.extract_strided_slice %4 {offsets = [7, 0], sizes = [1, 3], strides = [1, 1]} : vector<8x3xf32> to vector<1x3xf32>
    %242 = vector.broadcast %240 : vector<3x1xf32> to vector<3x3xf32>
    %243 = vector.broadcast %241 : vector<1x3xf32> to vector<3x3xf32>
    %244 = arith.addf %242, %243 : vector<3x3xf32>
    %cst_69 = arith.constant 0.000000e+00 : f32
    %245 = vector.broadcast %cst_69 : f32 to vector<3x3xf32>
    %246 = arith.cmpf oge, %244, %245 : vector<3x3xf32>
    %cst_70 = arith.constant 2.000000e-01 : f32
    %247 = vector.broadcast %cst_70 : f32 to vector<3x3xf32>
    %248 = arith.mulf %247, %244 : vector<3x3xf32>
    %249 = arith.select %246, %244, %248 : vector<3x3xi1>, vector<3x3xf32>
    %cst_71 = arith.constant -1.000000e+30 : f32
    %250 = vector.broadcast %cst_71 : f32 to vector<3x3xf32>
    %251 = arith.select %7, %249, %250 : vector<3x3xi1>, vector<3x3xf32>
    %cst_72 = arith.constant dense<0xFF800000> : vector<3xf32>
    %252 = vector.multi_reduction <maximumf>, %251, %cst_72 [1] : vector<3x3xf32> to vector<3xf32>
    %253 = vector.shape_cast %252 : vector<3xf32> to vector<3x1xf32>
    %254 = vector.broadcast %253 : vector<3x1xf32> to vector<3x3xf32>
    %255 = arith.subf %251, %254 : vector<3x3xf32>
    %256 = math.exp %255 : vector<3x3xf32>
    %cst_73 = arith.constant dense<0.000000e+00> : vector<3xf32>
    %257 = vector.multi_reduction <add>, %256, %cst_73 [1] : vector<3x3xf32> to vector<3xf32>
    %258 = vector.shape_cast %257 : vector<3xf32> to vector<3x1xf32>
    %259 = tpu.reciprocal %258 {approx = true} : vector<3x1xf32> -> vector<3x1xf32>
    %260 = vector.broadcast %259 : vector<3x1xf32> to vector<3x3xf32>
    %261 = arith.mulf %256, %260 : vector<3x3xf32>
    %262 = arith.truncf %261 : vector<3x3xf32> to vector<3x3xbf16>
    %263 = vector.extract_strided_slice %8 {offsets = [0, 56], sizes = [3, 8], strides = [1, 1]} : vector<3x64xbf16> to vector<3x8xbf16>
    %cst_74 = arith.constant dense<0.000000e+00> : vector<3x8xf32>
    %264 = tpu.matmul %262, %263, %cst_74 {dimension_numbers = #tpu.dot_dimension_numbers<[1], [0], [0], [1], [0, 0, 1, 1], [], []>} : vector<3x3xbf16>, vector<3x8xbf16>, vector<3x8xf32> -> vector<3x8xf32>
    %cst_75 = arith.constant 0.000000e+00 : f32
    %265 = vector.broadcast %cst_75 : f32 to vector<3x8xf32>
    %266 = arith.cmpf ogt, %264, %265 : vector<3x8xf32>
    %cst_76 = arith.constant 0.000000e+00 : f32
    %267 = vector.broadcast %cst_76 : f32 to vector<3x8xf32>
    %268 = arith.minimumf %264, %267 : vector<3x8xf32>
    %269 = math.exp %268 : vector<3x8xf32>
    %cst_77 = arith.constant 1.000000e+00 : f32
    %270 = vector.broadcast %cst_77 : f32 to vector<3x8xf32>
    %271 = arith.subf %269, %270 : vector<3x8xf32>
    %272 = arith.select %266, %264, %271 : vector<3x8xi1>, vector<3x8xf32>
    %273 = tpu.concatenate %41, %74, %107, %140, %173, %206, %239, %272 in 1 : vector<3x8xf32>, vector<3x8xf32>, vector<3x8xf32>, vector<3x8xf32>, vector<3x8xf32>, vector<3x8xf32>, vector<3x8xf32>, vector<3x8xf32> -> vector<3x64xf32>
    %274 = arith.truncf %273 : vector<3x64xf32> to vector<3x64xbf16>
    %c0_78 = arith.constant 0 : index
    %c0_79 = arith.constant 0 : index
    %275 = vector.load %arg5[%c0_78, %c0_79] : memref<64x6xbf16, #tpu.memory_space<vmem>>, vector<64x6xbf16>
    %cst_80 = arith.constant dense<0.000000e+00> : vector<3x6xf32>
    %276 = tpu.matmul %274, %275, %cst_80 {dimension_numbers = #tpu.dot_dimension_numbers<[1], [0], [0], [1], [0, 0, 1, 1], [], []>} : vector<3x64xbf16>, vector<64x6xbf16>, vector<3x6xf32> -> vector<3x6xf32>
    %c0_81 = arith.constant 0 : index
    %c0_82 = arith.constant 0 : index
    %277 = vector.load %arg6[%c0_81, %c0_82] : memref<3x6xf32, #tpu.memory_space<vmem>>, vector<3x6xf32>
    tpu.vector_store %arg6[%c0_81, %c0_82], %276 {strides = array<i32>} : memref<3x6xf32, #tpu.memory_space<vmem>>, vector<3x6xf32>,
    return
  }
  func.func @transform_0(%arg0: i32) -> (i32, i32) {
    %c0_i32 = arith.constant 0 : i32
    %c0_i32_0 = arith.constant 0 : i32
    return %arg0, %c0_i32 : i32, i32
  }
  func.func @transform_1(%arg0: i32) -> (i32, i32) {
    %c0_i32 = arith.constant 0 : i32
    %c0_i32_0 = arith.constant 0 : i32
    %c0_i32_1 = arith.constant 0 : i32
    return %c0_i32, %c0_i32_0 : i32, i32
  }
  func.func @transform_2(%arg0: i32) -> (i32, i32) {
    %c0_i32 = arith.constant 0 : i32
    %c0_i32_0 = arith.constant 0 : i32
    %c0_i32_1 = arith.constant 0 : i32
    return %c0_i32, %c0_i32_0 : i32, i32
  }
  func.func @transform_3(%arg0: i32) -> (i32, i32) {
    %c0_i32 = arith.constant 0 : i32
    %c0_i32_0 = arith.constant 0 : i32
    return %arg0, %c0_i32 : i32, i32
  }
  func.func @transform_4(%arg0: i32) -> (i32, i32) {
    %c0_i32 = arith.constant 0 : i32
    %c0_i32_0 = arith.constant 0 : i32
    %c0_i32_1 = arith.constant 0 : i32
    return %c0_i32, %c0_i32_0 : i32, i32
  }
  func.func @transform_5(%arg0: i32) -> (i32, i32) {
    %c0_i32 = arith.constant 0 : i32
    %c0_i32_0 = arith.constant 0 : i32
    return %arg0, %c0_i32 : i32, i32
  }
}

</mosaic_0001>

<llo_original>
// kernel: _gatnet_forward_impl.3
$region0: #{_gatnet_forward_impl.3}
  #allocation0 [shape = 'u32[]', space=smem, size = 0x4, offset = 0x4, fixed_abs, tag = 'smem constant byte address 0x4 - core index']
  #allocation1 [shape = 'u32[72,128]{1,0:T(1,128)}', space=vmem, size = 0x9000, scoped, tag = 'internal scratch']
  %s0 = inlined_call_operand.vmem [shape: bf16[3,16], index: 0, kind: input, shape index: {}]
  %s1 = inlined_call_operand.vmem [shape: bf16[16,80], index: 1, kind: input, shape index: {}]
  %s2 = inlined_call_operand.vmem [shape: bf16[3,64], index: 2, kind: output, shape index: {0}]
  %s3 = inlined_call_operand.vmem [shape: f32[3,16], index: 3, kind: output, shape index: {1}]
  %4 = xla_tuple %s2, %s3
  %s5 = sld [smem:[#allocation0]]
  $region26: #{_gatnet_forward_impl.3} parent=0
    _
  %s7 = ssub.s32 1, %s5
  %s8 = scalar_select 0, %s7, %s5
  // Predicated region
  $region2: #{_gatnet_forward_impl.3} parent=0 // pred_check
    _
  $region3: #{_gatnet_forward_impl.3} parent=0 // pred_check_branch
    %10 = sbr.rel (0) target = $region5
  $region4: #{_gatnet_forward_impl.3} parent=0 // pred_region
    _
  $region5: #{_gatnet_forward_impl.3} parent=0 // pred_fallthru
    _
  // Predicated region
  $region6: #{_gatnet_forward_impl.3} parent=0 // pred_check
    _
  $region7: #{_gatnet_forward_impl.3} parent=0 // pred_check_branch
    %12 = sbr.rel (0) target = $region9
  $region8: #{_gatnet_forward_impl.3} parent=0 // pred_region
    _
  $region9: #{_gatnet_forward_impl.3} parent=0 // pred_fallthru
    _
  %v14 = vld [vmem:[%s0] sm:$0x3]
  %v15 = vld [vmem:[%s1] sm:$0xf]
  %v16 = vld [vmem:[%s1 + $0x4] sm:$0xf]
  %v19 = vunpack.c.l.b16 %v15
  %v20 = vunpack.c.l.b16 %v16
  %v21 = vpack.c.b16 %v20, %v19
  %vm23 = vcmask 130048
  %v25 = vsel %vm23, %v14, 0
  %27 = vmatpush.bf16.msra.mxu0 0
  %28 = vmatpush.bf16.msra.mxu0 0
  %29 = vmatpush.bf16.msra.mxu0 0
  %30 = vmatpush.bf16.msra.mxu0 0
  %31 = vmatpush.bf16.msra.mxu0 0
  %32 = vmatpush.bf16.msra.mxu0 0
  %33 = vmatpush.bf16.msra.mxu0 0
  %34 = vmatpush.bf16.msra.mxu0 %v21
  %35 = vmatmul.bf16.gmra.mxu0 %v25
  %v36 = vpop.f32.mrf.mxu0
  %v37 = vadd.f32 0.0, %v36
  %v38 = vpop.f32.mrf.mxu0
  %39 = vdwg.mxu0
  %v40 = vpack.c.bf16 %v37, %v37
  %vm41 = vcmask 517120
  %vm42 = vsmask.f32 1280
  %vm43 = vmand %vm41, %vm42
  %v44 = vld [vmem:[%s2] sm:$0x3]
  %v45 = vsel %vm43, %v40, %v44
  %46 = vst [vmem:[%s2] sm:$0x3] %v45
  %48 = vrot.lane.b32.xlu0 %v37, 64
  %v49 = vpop.permute.xlu0 %48
  %vm51 = vcmask 124928
  %52 = vst.msk [vmem:[%s3] sm:$0x7] %vm51, %v49
  // Predicated region
  $region10: #{_gatnet_forward_impl.3} parent=0 // pred_check
    _
  $region11: #{_gatnet_forward_impl.3} parent=0 // pred_check_branch
    %54 = sbr.rel (0) target = $region13
  $region12: #{_gatnet_forward_impl.3} parent=0 // pred_region
    _
  $region13: #{_gatnet_forward_impl.3} parent=0 // pred_fallthru
    _
  // Predicated region
  $region14: #{_gatnet_forward_impl.3} parent=0 // pred_check
    _
  $region15: #{_gatnet_forward_impl.3} parent=0 // pred_check_branch
    %56 = sbr.rel (0) target = $region17
  $region16: #{_gatnet_forward_impl.3} parent=0 // pred_region
    _
  $region17: #{_gatnet_forward_impl.3} parent=0 // pred_fallthru
    _
  // Predicated region
  $region18: #{_gatnet_forward_impl.3} parent=0 // pred_check
    _
  $region19: #{_gatnet_forward_impl.3} parent=0 // pred_check_branch
    %58 = sbr.rel (0) target = $region21
  $region20: #{_gatnet_forward_impl.3} parent=0 // pred_region
    _
  $region21: #{_gatnet_forward_impl.3} parent=0 // pred_fallthru
    _
  // Predicated region
  $region22: #{_gatnet_forward_impl.3} parent=0 // pred_check
    _
  $region23: #{_gatnet_forward_impl.3} parent=0 // pred_check_branch
    %60 = sbr.rel (0) target = $region25
  $region24: #{_gatnet_forward_impl.3} parent=0 // pred_region
    _
  $region25: #{_gatnet_forward_impl.3} parent=0 // pred_fallthru
    _

// kernel: _gatnet_forward_impl.5
$region0: #{_gatnet_forward_impl.5}
  #allocation0 [shape = 'u32[]', space=smem, size = 0x4, offset = 0x4, fixed_abs, tag = 'smem constant byte address 0x4 - core index']
  #allocation1 [shape = 'u32[72,128]{1,0:T(1,128)}', space=vmem, size = 0x9000, scoped, tag = 'internal scratch']
  %s0 = inlined_call_operand.vmem [shape: f32[3,6], index: 0, kind: input, shape index: {}, may-alias: {0,1}]
  %s1 = inlined_call_operand.vmem [shape: f32[3,6], index: 1, kind: input, shape index: {}, may-alias: {0,1}]
  %s2 = inlined_call_operand.vmem [shape: s8[3,3], index: 2, kind: input, shape index: {}]
  %s3 = inlined_call_operand.hbm [shape: f32[3,4], index: 3, kind: output, shape index: {}]
  %s4 = sld [smem:[#allocation0]]
  $region22: #{_gatnet_forward_impl.5} parent=0
    _
  %s6 = ssub.s32 1, %s4
  %s7 = scalar_select 0, %s6, %s4
  $region1: #{_gatnet_forward_impl.5} parent=0
    #allocation2 [shape = 'u8[2048]{0}', space=vmem, size = 0x800, scoped, tag = 'output window, operand 0, single buffered']
    #allocation3 [shape = 's32[1]{0}', space=sflag, size = 0x4, scoped, tag = 'scoped memory for _gatnet_forward_impl.5']
    %8 = vsyncpa [#allocation3], 0
    // Predicated region
    $region2: #{_gatnet_forward_impl.5} parent=1 // pred_check
      _
    $region3: #{_gatnet_forward_impl.5} parent=1 // pred_check_branch
      %10 = sbr.rel (0) target = $region5
    $region4: #{_gatnet_forward_impl.5} parent=1 // pred_region
      _
    $region5: #{_gatnet_forward_impl.5} parent=1 // pred_fallthru
      _
    // Predicated region
    $region6: #{_gatnet_forward_impl.5} parent=1 // pred_check
      _
    $region7: #{_gatnet_forward_impl.5} parent=1 // pred_check_branch
      %12 = sbr.rel (0) target = $region9
    $region8: #{_gatnet_forward_impl.5} parent=1 // pred_region
      _
    $region9: #{_gatnet_forward_impl.5} parent=1 // pred_fallthru
      _
    // Predicated region
    $region10: #{_gatnet_forward_impl.5} parent=1 // pred_check
      _
    $region11: #{_gatnet_forward_impl.5} parent=1 // pred_check_branch
      %14 = sbr.rel (0) target = $region13
    $region12: #{_gatnet_forward_impl.5} parent=1 // pred_region
      _
    $region13: #{_gatnet_forward_impl.5} parent=1 // pred_fallthru
      _
    %v18 = vld [vmem:[%s1] sm:$0x7]
    %v19 = vld [vmem:[%s0] sm:$0x7]
    %21 = vrot.lane.b32.xlu0 %v18, 123
    %v22 = vpop.permute.xlu0 %21
    %24 = vxpose.xlu0.b32.start [1/16] %v22, 128
    %25 = vxpose.xlu0.b32.cont [2/16] 0.0, 128
    %26 = vxpose.xlu0.b32.cont [3/16] 0.0, 128
    %27 = vxpose.xlu0.b32.cont [4/16] 0.0, 128
    %28 = vxpose.xlu0.b32.cont [5/16] 0.0, 128
    %29 = vxpose.xlu0.b32.cont [6/16] 0.0, 128
    %30 = vxpose.xlu0.b32.cont [7/16] 0.0, 128
    %31 = vxpose.xlu0.b32.cont [8/16] 0.0, 128
    %32 = vxpose.xlu0.b32.cont [9/16] 0.0, 128
    %33 = vxpose.xlu0.b32.cont [10/16] 0.0, 128
    %34 = vxpose.xlu0.b32.cont [11/16] 0.0, 128
    %35 = vxpose.xlu0.b32.cont [12/16] 0.0, 128
    %36 = vxpose.xlu0.b32.cont [13/16] 0.0, 128
    %37 = vxpose.xlu0.b32.cont [14/16] 0.0, 128
    %38 = vxpose.xlu0.b32.cont [15/16] 0.0, 128
    %39 = vxpose.xlu0.b32.end [16/16] 0.0, 128
    %v40 = vpop.trf.xlu0
    %v41 = vpop.trf.xlu0
    %v42 = vpop.trf.xlu0
    %v43 = vpop.trf.xlu0
    %v44 = vpop.trf.xlu0
    %v45 = vpop.trf.xlu0
    %v46 = vpop.trf.xlu0
    %v47 = vpop.trf.xlu0
    %v48 = vpop.trf.xlu0
    %v49 = vpop.trf.xlu0
    %v50 = vpop.trf.xlu0
    %v51 = vpop.trf.xlu0
    %v52 = vpop.trf.xlu0
    %v53 = vpop.trf.xlu0
    %v54 = vpop.trf.xlu0
    %v55 = vpop.trf.xlu0
    %v56 = vpack.c.bf16 %v18, %v18
    %v57 = vld [vmem:[%s2] sm:$0x1]
    %vm58 = vnez %v57
    %60 = vset.pattern.permute.xlu0 4
    %61 = vperm.xlu0 %60, %v19
    %v62 = vpop.permute.xlu0 %61
    %v64 = vperm.slane %v40, 0
    %v65 = vadd.f32 %v62, %v64
    %vm66 = vcmp.ge.f32.partialorder %v65, 0.0
    %v67 = vmul.f32 %v65, 0.2
    %v68 = vsel %vm66, %v65, %v67
    %v69 = vsel %vm58, 16843009, 0
    %v70 = vunpack.c.0.s8 %v69
    %vm71 = vcmp.ne.s32.totalorder %v70, 0
    %v72 = vsel %vm71, %v68, -1e+30
    %vm73 = vcmask 18432
    %v74 = vsel %vm73, %v72, -inf
    %75 = vmax.xlane.f32.xlu0 %v74
    %v76 = vpop.xlane.xlu0 %75
    %v77 = vsub.f32 %v72, %v76
    %v78 = vmul.f32 %v77, 1.442695
    %v79 = vpow.pop %v78
    %v80 = vsel %vm73, %v79, 0.0
    %81 = vadd.xlane.f32.xlu0 %v80
    %v82 = vpop.xlane.xlu0 %81
    %v83 = vrcp.pop %v82
    %v84 = vmul.f32 %v79, %v83
    %v85 = vpack.c.bf16 %v84, %v84
    %vm86 = vcmask 23552
    %v88 = vsel %vm86, %v85, 0
    %vm90 = vcmask 1040384
    %vm91 = vcmask 1041408
    %v92 = vsel %vm90, 4294967295, 65535
    %v93 = vsel %vm91, %v92, 0
    %v95 = vand.u32 %v56, %v93
    %97 = vmatpush.bf16.msra.mxu0 0
    %98 = vmatpush.bf16.msra.mxu0 0
    %99 = vmatpush.bf16.msra.mxu0 0
    %100 = vmatpush.bf16.msra.mxu0 0
    %101 = vmatpush.bf16.msra.mxu0 0
    %102 = vmatpush.bf16.msra.mxu0 0
    %103 = vmatpush.bf16.msra.mxu0 0
    %104 = vmatpush.bf16.msra.mxu0 %v95
    %105 = vmatmul.bf16.gmra.mxu0 %v88
    %v106 = vpop.f32.mrf.mxu0
    %v107 = vadd.f32 0.0, %v106
    %v108 = vpop.f32.mrf.mxu0
    %109 = vdwg.mxu0
    %vm110 = vcmask 26624
    %v111 = vsel %vm110, %v107, -inf
    %112 = vmax.xlane.f32.xlu0 %v111
    %v113 = vpop.xlane.xlu0 %112
    %v114 = vsub.f32 %v107, %v113
    %v115 = vmul.f32 %v114, 1.442695
    %v116 = vpow.pop %v115
    %v117 = vsel %vm110, %v116, 0.0
    %118 = vadd.xlane.f32.xlu0 %v117
    %v119 = vpop.xlane.xlu0 %118
    %v120 = vlog2.pop %v119
    %v121 = vmul.f32 %v120, 0.6931472
    %v122 = vsub.f32 %v114, %v121
    %123 = vst.msk [vmem:[#allocation2] sm:$0x7] %vm110, %v122
    // Predicated region
    $region14: #{_gatnet_forward_impl.5} parent=1 // pred_check
      _
    $region15: #{_gatnet_forward_impl.5} parent=1 // pred_check_branch
      %125 = sbr.rel (0) target = $region17
    $region16: #{_gatnet_forward_impl.5} parent=1 // pred_region
      %127 = vsyncadd [#allocation3], 0
      %s129 = sshll.u32 [#allocation2], 4
      %s130 = int_to_ptr.vmem [resolvable:$true] %s129
      %s131 = sshll.u32 %s3, 4
      %s132 = int_to_ptr.hbm [resolvable:$true] %s131
      %134 = dma.vmem_to_hbm [thread:$0]  %s130, 64, %s132, [#allocation3]
    $region17: #{_gatnet_forward_impl.5} parent=1 // pred_fallthru
      _
    // Predicated region
    $region18: #{_gatnet_forward_impl.5} parent=1 // pred_check
      _
    $region19: #{_gatnet_forward_impl.5} parent=1 // pred_check_branch
      %136 = sbr.rel (0) target = $region21
    $region20: #{_gatnet_forward_impl.5} parent=1 // pred_region
      %138 = dma.done [#allocation3], 64
    $region21: #{_gatnet_forward_impl.5} parent=1 // pred_fallthru
      _
    %139 = vsyncpa [#allocation3], 1

// kernel: _gatnet_forward_impl.4
$region0: #{_gatnet_forward_impl.4}
  #allocation0 [shape = 'u32[]', space=smem, size = 0x4, offset = 0x4, fixed_abs, tag = 'smem constant byte address 0x4 - core index']
  #allocation1 [shape = 'u32[72,128]{1,0:T(1,128)}', space=vmem, size = 0x9000, scoped, tag = 'internal scratch']
  %s0 = inlined_call_operand.vmem [shape: f32[3,16], index: 0, kind: input, shape index: {}, may-alias: {0,1}]
  %s1 = inlined_call_operand.vmem [shape: f32[3,16], index: 1, kind: input, shape index: {}, may-alias: {0,1}]
  %s2 = inlined_call_operand.vmem [shape: bf16[3,64], index: 2, kind: input, shape index: {}]
  %s3 = inlined_call_operand.vmem [shape: s8[3,3], index: 3, kind: input, shape index: {}]
  %s4 = inlined_call_operand.vmem [shape: bf16[64,6], index: 4, kind: input, shape index: {}]
  %s5 = inlined_call_operand.vmem [shape: f32[3,6], index: 5, kind: output, shape index: {}]
  %s6 = sld [smem:[#allocation0]]
  $region30: #{_gatnet_forward_impl.4} parent=0
    _
  %s8 = ssub.s32 1, %s6
  %s9 = scalar_select 0, %s8, %s6
  // Predicated region
  $region2: #{_gatnet_forward_impl.4} parent=0 // pred_check
    _
  $region3: #{_gatnet_forward_impl.4} parent=0 // pred_check_branch
    %11 = sbr.rel (0) target = $region5
  $region4: #{_gatnet_forward_impl.4} parent=0 // pred_region
    _
  $region5: #{_gatnet_forward_impl.4} parent=0 // pred_fallthru
    _
  // Predicated region
  $region6: #{_gatnet_forward_impl.4} parent=0 // pred_check
    _
  $region7: #{_gatnet_forward_impl.4} parent=0 // pred_check_branch
    %13 = sbr.rel (0) target = $region9
  $region8: #{_gatnet_forward_impl.4} parent=0 // pred_region
    _
  $region9: #{_gatnet_forward_impl.4} parent=0 // pred_fallthru
    _
  // Predicated region
  $region10: #{_gatnet_forward_impl.4} parent=0 // pred_check
    _
  $region11: #{_gatnet_forward_impl.4} parent=0 // pred_check_branch
    %15 = sbr.rel (0) target = $region13
  $region12: #{_gatnet_forward_impl.4} parent=0 // pred_region
    _
  $region13: #{_gatnet_forward_impl.4} parent=0 // pred_fallthru
    _
  // Predicated region
  $region14: #{_gatnet_forward_impl.4} parent=0 // pred_check
    _
  $region15: #{_gatnet_forward_impl.4} parent=0 // pred_check_branch
    %17 = sbr.rel (0) target = $region17
  $region16: #{_gatnet_forward_impl.4} parent=0 // pred_region
    _
  $region17: #{_gatnet_forward_impl.4} parent=0 // pred_fallthru
    _
  // Predicated region
  $region18: #{_gatnet_forward_impl.4} parent=0 // pred_check
    _
  $region19: #{_gatnet_forward_impl.4} parent=0 // pred_check_branch
    %19 = sbr.rel (0) target = $region21
  $region20: #{_gatnet_forward_impl.4} parent=0 // pred_region
    _
  $region21: #{_gatnet_forward_impl.4} parent=0 // pred_fallthru
    _
  %v23 = vld [vmem:[%s0] sm:$0x7]
  %v24 = vld [vmem:[%s1] sm:$0x7]
  %26 = vrot.lane.b32.xlu0 %v24, 120
  %v27 = vpop.permute.xlu0 %26
  %29 = vxpose.xlu0.b32.start [1/16] %v27, 128
  %30 = vxpose.xlu0.b32.cont [2/16] 0.0, 128
  %31 = vxpose.xlu0.b32.cont [3/16] 0.0, 128
  %32 = vxpose.xlu0.b32.cont [4/16] 0.0, 128
  %33 = vxpose.xlu0.b32.cont [5/16] 0.0, 128
  %34 = vxpose.xlu0.b32.cont [6/16] 0.0, 128
  %35 = vxpose.xlu0.b32.cont [7/16] 0.0, 128
  %36 = vxpose.xlu0.b32.cont [8/16] 0.0, 128
  %37 = vxpose.xlu0.b32.cont [9/16] 0.0, 128
  %38 = vxpose.xlu0.b32.cont [10/16] 0.0, 128
  %39 = vxpose.xlu0.b32.cont [11/16] 0.0, 128
  %40 = vxpose.xlu0.b32.cont [12/16] 0.0, 128
  %41 = vxpose.xlu0.b32.cont [13/16] 0.0, 128
  %42 = vxpose.xlu0.b32.cont [14/16] 0.0, 128
  %43 = vxpose.xlu0.b32.cont [15/16] 0.0, 128
  %44 = vxpose.xlu0.b32.end [16/16] 0.0, 128
  %v45 = vpop.trf.xlu0
  %v46 = vpop.trf.xlu0
  %v47 = vpop.trf.xlu0
  %v48 = vpop.trf.xlu0
  %v49 = vpop.trf.xlu0
  %v50 = vpop.trf.xlu0
  %v51 = vpop.trf.xlu0
  %v52 = vpop.trf.xlu0
  %v53 = vpop.trf.xlu0
  %v54 = vpop.trf.xlu0
  %v55 = vpop.trf.xlu0
  %v56 = vpop.trf.xlu0
  %v57 = vpop.trf.xlu0
  %v58 = vpop.trf.xlu0
  %v59 = vpop.trf.xlu0
  %v60 = vpop.trf.xlu0
  %v61 = vld [vmem:[%s3] sm:$0x1]
  %vm62 = vnez %v61
  %v63 = vld [vmem:[%s2] sm:$0x3]
  %65 = vset.pattern.permute.xlu0 0
  %66 = vperm.xlu0 %65, %v23
  %v67 = vpop.permute.xlu0 %66
  %v69 = vperm.slane %v45, 0
  %v70 = vadd.f32 %v67, %v69
  %vm71 = vcmp.ge.f32.partialorder %v70, 0.0
  %v72 = vmul.f32 %v70, 0.2
  %v73 = vsel %vm71, %v70, %v72
  %v74 = vsel %vm62, 16843009, 0
  %v75 = vunpack.c.0.s8 %v74
  %vm76 = vcmp.ne.s32.totalorder %v75, 0
  %v77 = vsel %vm76, %v73, -1e+30
  %vm78 = vcmask 18432
  %v79 = vsel %vm78, %v77, -inf
  %80 = vmax.xlane.f32.xlu0 %v79
  %v81 = vpop.xlane.xlu0 %80
  %v82 = vsub.f32 %v77, %v81
  %v83 = vmul.f32 %v82, 1.442695
  %v84 = vpow.pop %v83
  %v85 = vsel %vm78, %v84, 0.0
  %86 = vadd.xlane.f32.xlu0 %v85
  %v87 = vpop.xlane.xlu0 %86
  %v88 = vrcp.pop %v87
  %v89 = vmul.f32 %v84, %v88
  %v90 = vpack.c.bf16 %v89, %v89
  %vm91 = vcmask 23552
  %v93 = vsel %vm91, %v90, 0
  %vm95 = vcmask 1040384
  %vm96 = vcmask 1041408
  %v97 = vsel %vm95, 4294967295, 65535
  %v98 = vsel %vm96, %v97, 0
  %v100 = vand.u32 %v63, %v98
  %102 = vmatpush.bf16.msra.mxu0 0
  %103 = vmatpush.bf16.msra.mxu0 0
  %104 = vmatpush.bf16.msra.mxu0 0
  %105 = vmatpush.bf16.msra.mxu0 0
  %106 = vmatpush.bf16.msra.mxu0 0
  %107 = vmatpush.bf16.msra.mxu0 0
  %108 = vmatpush.bf16.msra.mxu0 0
  %109 = vmatpush.bf16.msra.mxu0 %v100
  %110 = vmatmul.bf16.gmra.mxu0 %v93
  %v111 = vpop.f32.mrf.mxu0
  %v112 = vadd.f32 0.0, %v111
  %v113 = vpop.f32.mrf.mxu0
  %114 = vdwg.mxu0
  %vm115 = vcmp.gt.f32.partialorder %v112, 0.0
  %v116 = vmin.f32 %v112, 0.0
  %v117 = vmul.f32 %v116, 1.442695
  %v118 = vpow.pop %v117
  %v119 = vsub.f32 %v118, 1.0
  %v120 = vsel %vm115, %v112, %v119
  %121 = vset.pattern.permute.xlu0 1
  %122 = vperm.xlu0 %121, %v23
  %v123 = vpop.permute.xlu0 %122
  %v125 = vperm.slane %v45, 1
  %v126 = vadd.f32 %v123, %v125
  %vm127 = vcmp.ge.f32.partialorder %v126, 0.0
  %v128 = vmul.f32 %v126, 0.2
  %v129 = vsel %vm127, %v126, %v128
  %v130 = vsel %vm76, %v129, -1e+30
  %v131 = vsel %vm78, %v130, -inf
  %132 = vmax.xlane.f32.xlu0 %v131
  %v133 = vpop.xlane.xlu0 %132
  %v134 = vsub.f32 %v130, %v133
  %v135 = vmul.f32 %v134, 1.442695
  %v136 = vpow.pop %v135
  %v137 = vsel %vm78, %v136, 0.0
  %138 = vadd.xlane.f32.xlu0 %v137
  %v139 = vpop.xlane.xlu0 %138
  %v140 = vrcp.pop %v139
  %v141 = vmul.f32 %v136, %v140
  %v142 = vpack.c.bf16 %v141, %v141
  %143 = vst [vmem:[#allocation1] ss:$4 sm:$0xff] %v63
  %v144 = vld.sshfl [vmem:[#allocation1] sm:$0xff pattern:$0x73625140]
  %146 = vrot.lane.b32.xlu0 %v144, 120
  %v147 = vpop.permute.xlu0 %146
  %v149 = vsel %vm91, %v142, 0
  %v152 = vand.u32 %v147, %v98
  %154 = vmatpush.bf16.msra.mxu0 0
  %155 = vmatpush.bf16.msra.mxu0 0
  %156 = vmatpush.bf16.msra.mxu0 0
  %157 = vmatpush.bf16.msra.mxu0 0
  %158 = vmatpush.bf16.msra.mxu0 0
  %159 = vmatpush.bf16.msra.mxu0 0
  %160 = vmatpush.bf16.msra.mxu0 0
  %161 = vmatpush.bf16.msra.mxu0 %v152
  %162 = vmatmul.bf16.gmra.mxu0 %v149
  %v163 = vpop.f32.mrf.mxu0
  %v164 = vadd.f32 0.0, %v163
  %v165 = vpop.f32.mrf.mxu0
  %166 = vdwg.mxu0
  %vm167 = vcmp.gt.f32.partialorder %v164, 0.0
  %v168 = vmin.f32 %v164, 0.0
  %v169 = vmul.f32 %v168, 1.442695
  %v170 = vpow.pop %v169
  %v171 = vsub.f32 %v170, 1.0
  %v172 = vsel %vm167, %v164, %v171
  %173 = vset.pattern.permute.xlu0 2
  %174 = vperm.xlu0 %173, %v23
  %v175 = vpop.permute.xlu0 %174
  %v177 = vperm.slane %v45, 2
  %v178 = vadd.f32 %v175, %v177
  %vm179 = vcmp.ge.f32.partialorder %v178, 0.0
  %v180 = vmul.f32 %v178, 0.2
  %v181 = vsel %vm179, %v178, %v180
  %v182 = vsel %vm76, %v181, -1e+30
  %v183 = vsel %vm78, %v182, -inf
  %184 = vmax.xlane.f32.xlu0 %v183
  %v185 = vpop.xlane.xlu0 %184
  %v186 = vsub.f32 %v182, %v185
  %v187 = vmul.f32 %v186, 1.442695
  %v188 = vpow.pop %v187
  %v189 = vsel %vm78, %v188, 0.0
  %190 = vadd.xlane.f32.xlu0 %v189
  %v191 = vpop.xlane.xlu0 %190
  %v192 = vrcp.pop %v191
  %v193 = vmul.f32 %v188, %v192
  %v194 = vpack.c.bf16 %v193, %v193
  %195 = vst [vmem:[#allocation1] ss:$4 sm:$0xff] %v63
  %v196 = vld.sshfl [vmem:[#allocation1] sm:$0xff pattern:$0x73625140]
  %198 = vrot.lane.b32.xlu0 %v196, 112
  %v199 = vpop.permute.xlu0 %198
  %v201 = vsel %vm91, %v194, 0
  %v204 = vand.u32 %v199, %v98
  %206 = vmatpush.bf16.msra.mxu0 0
  %207 = vmatpush.bf16.msra.mxu0 0
  %208 = vmatpush.bf16.msra.mxu0 0
  %209 = vmatpush.bf16.msra.mxu0 0
  %210 = vmatpush.bf16.msra.mxu0 0
  %211 = vmatpush.bf16.msra.mxu0 0
  %212 = vmatpush.bf16.msra.mxu0 0
  %213 = vmatpush.bf16.msra.mxu0 %v204
  %214 = vmatmul.bf16.gmra.mxu0 %v201
  %v215 = vpop.f32.mrf.mxu0
  %v216 = vadd.f32 0.0, %v215
  %v217 = vpop.f32.mrf.mxu0
  %218 = vdwg.mxu0
  %vm219 = vcmp.gt.f32.partialorder %v216, 0.0
  %v220 = vmin.f32 %v216, 0.0
  %v221 = vmul.f32 %v220, 1.442695
  %v222 = vpow.pop %v221
  %v223 = vsub.f32 %v222, 1.0
  %v224 = vsel %vm219, %v216, %v223
  %225 = vset.pattern.permute.xlu0 3
  %226 = vperm.xlu0 %225, %v23
  %v227 = vpop.permute.xlu0 %226
  %v229 = vperm.slane %v45, 3
  %v230 = vadd.f32 %v227, %v229
  %vm231 = vcmp.ge.f32.partialorder %v230, 0.0
  %v232 = vmul.f32 %v230, 0.2
  %v233 = vsel %vm231, %v230, %v232
  %v234 = vsel %vm76, %v233, -1e+30
  %v235 = vsel %vm78, %v234, -inf
  %236 = vmax.xlane.f32.xlu0 %v235
  %v237 = vpop.xlane.xlu0 %236
  %v238 = vsub.f32 %v234, %v237
  %v239 = vmul.f32 %v238, 1.442695
  %v240 = vpow.pop %v239
  %v241 = vsel %vm78, %v240, 0.0
  %242 = vadd.xlane.f32.xlu0 %v241
  %v243 = vpop.xlane.xlu0 %242
  %v244 = vrcp.pop %v243
  %v245 = vmul.f32 %v240, %v244
  %v246 = vpack.c.bf16 %v245, %v245
  %247 = vst [vmem:[#allocation1] ss:$4 sm:$0xff] %v63
  %v248 = vld.sshfl [vmem:[#allocation1] sm:$0xff pattern:$0x73625140]
  %250 = vrot.lane.b32.xlu0 %v248, 104
  %v251 = vpop.permute.xlu0 %250
  %v253 = vsel %vm91, %v246, 0
  %v256 = vand.u32 %v251, %v98
  %258 = vmatpush.bf16.msra.mxu0 0
  %259 = vmatpush.bf16.msra.mxu0 0
  %260 = vmatpush.bf16.msra.mxu0 0
  %261 = vmatpush.bf16.msra.mxu0 0
  %262 = vmatpush.bf16.msra.mxu0 0
  %263 = vmatpush.bf16.msra.mxu0 0
  %264 = vmatpush.bf16.msra.mxu0 0
  %265 = vmatpush.bf16.msra.mxu0 %v256
  %266 = vmatmul.bf16.gmra.mxu0 %v253
  %v267 = vpop.f32.mrf.mxu0
  %v268 = vadd.f32 0.0, %v267
  %v269 = vpop.f32.mrf.mxu0
  %270 = vdwg.mxu0
  %vm271 = vcmp.gt.f32.partialorder %v268, 0.0
  %v272 = vmin.f32 %v268, 0.0
  %v273 = vmul.f32 %v272, 1.442695
  %v274 = vpow.pop %v273
  %v275 = vsub.f32 %v274, 1.0
  %v276 = vsel %vm271, %v268, %v275
  %277 = vset.pattern.permute.xlu0 4
  %278 = vperm.xlu0 %277, %v23
  %v279 = vpop.permute.xlu0 %278
  %v281 = vperm.slane %v45, 4
  %v282 = vadd.f32 %v279, %v281
  %vm283 = vcmp.ge.f32.partialorder %v282, 0.0
  %v284 = vmul.f32 %v282, 0.2
  %v285 = vsel %vm283, %v282, %v284
  %v286 = vsel %vm76, %v285, -1e+30
  %v287 = vsel %vm78, %v286, -inf
  %288 = vmax.xlane.f32.xlu0 %v287
  %v289 = vpop.xlane.xlu0 %288
  %v290 = vsub.f32 %v286, %v289
  %v291 = vmul.f32 %v290, 1.442695
  %v292 = vpow.pop %v291
  %v293 = vsel %vm78, %v292, 0.0
  %294 = vadd.xlane.f32.xlu0 %v293
  %v295 = vpop.xlane.xlu0 %294
  %v296 = vrcp.pop %v295
  %v297 = vmul.f32 %v292, %v296
  %v298 = vpack.c.bf16 %v297, %v297
  %299 = vst [vmem:[#allocation1] ss:$4 sm:$0xff] %v63
  %v300 = vld.sshfl [vmem:[#allocation1] sm:$0xff pattern:$0x73625140]
  %302 = vrot.lane.b32.xlu0 %v300, 96
  %v303 = vpop.permute.xlu0 %302
  %v305 = vsel %vm91, %v298, 0
  %v308 = vand.u32 %v303, %v98
  %310 = vmatpush.bf16.msra.mxu0 0
  %311 = vmatpush.bf16.msra.mxu0 0
  %312 = vmatpush.bf16.msra.mxu0 0
  %313 = vmatpush.bf16.msra.mxu0 0
  %314 = vmatpush.bf16.msra.mxu0 0
  %315 = vmatpush.bf16.msra.mxu0 0
  %316 = vmatpush.bf16.msra.mxu0 0
  %317 = vmatpush.bf16.msra.mxu0 %v308
  %318 = vmatmul.bf16.gmra.mxu0 %v305
  %v319 = vpop.f32.mrf.mxu0
  %v320 = vadd.f32 0.0, %v319
  %v321 = vpop.f32.mrf.mxu0
  %322 = vdwg.mxu0
  %vm323 = vcmp.gt.f32.partialorder %v320, 0.0
  %v324 = vmin.f32 %v320, 0.0
  %v325 = vmul.f32 %v324, 1.442695
  %v326 = vpow.pop %v325
  %v327 = vsub.f32 %v326, 1.0
  %v328 = vsel %vm323, %v320, %v327
  %329 = vset.pattern.permute.xlu0 5
  %330 = vperm.xlu0 %329, %v23
  %v331 = vpop.permute.xlu0 %330
  %v333 = vperm.slane %v45, 5
  %v334 = vadd.f32 %v331, %v333
  %vm335 = vcmp.ge.f32.partialorder %v334, 0.0
  %v336 = vmul.f32 %v334, 0.2
  %v337 = vsel %vm335, %v334, %v336
  %v338 = vsel %vm76, %v337, -1e+30
  %v339 = vsel %vm78, %v338, -inf
  %340 = vmax.xlane.f32.xlu0 %v339
  %v341 = vpop.xlane.xlu0 %340
  %v342 = vsub.f32 %v338, %v341
  %v343 = vmul.f32 %v342, 1.442695
  %v344 = vpow.pop %v343
  %v345 = vsel %vm78, %v344, 0.0
  %346 = vadd.xlane.f32.xlu0 %v345
  %v347 = vpop.xlane.xlu0 %346
  %v348 = vrcp.pop %v347
  %v349 = vmul.f32 %v344, %v348
  %v350 = vpack.c.bf16 %v349, %v349
  %351 = vst [vmem:[#allocation1] ss:$4 sm:$0xff] %v63
  %v352 = vld.sshfl [vmem:[#allocation1] sm:$0xff pattern:$0x73625140]
  %354 = vrot.lane.b32.xlu0 %v352, 88
  %v355 = vpop.permute.xlu0 %354
  %v357 = vsel %vm91, %v350, 0
  %v360 = vand.u32 %v355, %v98
  %362 = vmatpush.bf16.msra.mxu0 0
  %363 = vmatpush.bf16.msra.mxu0 0
  %364 = vmatpush.bf16.msra.mxu0 0
  %365 = vmatpush.bf16.msra.mxu0 0
  %366 = vmatpush.bf16.msra.mxu0 0
  %367 = vmatpush.bf16.msra.mxu0 0
  %368 = vmatpush.bf16.msra.mxu0 0
  %369 = vmatpush.bf16.msra.mxu0 %v360
  %370 = vmatmul.bf16.gmra.mxu0 %v357
  %v371 = vpop.f32.mrf.mxu0
  %v372 = vadd.f32 0.0, %v371
  %v373 = vpop.f32.mrf.mxu0
  %374 = vdwg.mxu0
  %vm375 = vcmp.gt.f32.partialorder %v372, 0.0
  %v376 = vmin.f32 %v372, 0.0
  %v377 = vmul.f32 %v376, 1.442695
  %v378 = vpow.pop %v377
  %v379 = vsub.f32 %v378, 1.0
  %v380 = vsel %vm375, %v372, %v379
  %381 = vset.pattern.permute.xlu0 6
  %382 = vperm.xlu0 %381, %v23
  %v383 = vpop.permute.xlu0 %382
  %v385 = vperm.slane %v45, 6
  %v386 = vadd.f32 %v383, %v385
  %vm387 = vcmp.ge.f32.partialorder %v386, 0.0
  %v388 = vmul.f32 %v386, 0.2
  %v389 = vsel %vm387, %v386, %v388
  %v390 = vsel %vm76, %v389, -1e+30
  %v391 = vsel %vm78, %v390, -inf
  %392 = vmax.xlane.f32.xlu0 %v391
  %v393 = vpop.xlane.xlu0 %392
  %v394 = vsub.f32 %v390, %v393
  %v395 = vmul.f32 %v394, 1.442695
  %v396 = vpow.pop %v395
  %v397 = vsel %vm78, %v396, 0.0
  %398 = vadd.xlane.f32.xlu0 %v397
  %v399 = vpop.xlane.xlu0 %398
  %v400 = vrcp.pop %v399
  %v401 = vmul.f32 %v396, %v400
  %v402 = vpack.c.bf16 %v401, %v401
  %403 = vst [vmem:[#allocation1] ss:$4 sm:$0xff] %v63
  %v404 = vld.sshfl [vmem:[#allocation1] sm:$0xff pattern:$0x73625140]
  %406 = vrot.lane.b32.xlu0 %v404, 80
  %v407 = vpop.permute.xlu0 %406
  %v409 = vsel %vm91, %v402, 0
  %v412 = vand.u32 %v407, %v98
  %414 = vmatpush.bf16.msra.mxu0 0
  %415 = vmatpush.bf16.msra.mxu0 0
  %416 = vmatpush.bf16.msra.mxu0 0
  %417 = vmatpush.bf16.msra.mxu0 0
  %418 = vmatpush.bf16.msra.mxu0 0
  %419 = vmatpush.bf16.msra.mxu0 0
  %420 = vmatpush.bf16.msra.mxu0 0
  %421 = vmatpush.bf16.msra.mxu0 %v412
  %422 = vmatmul.bf16.gmra.mxu0 %v409
  %v423 = vpop.f32.mrf.mxu0
  %v424 = vadd.f32 0.0, %v423
  %v425 = vpop.f32.mrf.mxu0
  %426 = vdwg.mxu0
  %vm427 = vcmp.gt.f32.partialorder %v424, 0.0
  %v428 = vmin.f32 %v424, 0.0
  %v429 = vmul.f32 %v428, 1.442695
  %v430 = vpow.pop %v429
  %v431 = vsub.f32 %v430, 1.0
  %v432 = vsel %vm427, %v424, %v431
  %433 = vset.pattern.permute.xlu0 7
  %434 = vperm.xlu0 %433, %v23
  %v435 = vpop.permute.xlu0 %434
  %v437 = vperm.slane %v45, 7
  %v438 = vadd.f32 %v435, %v437
  %vm439 = vcmp.ge.f32.partialorder %v438, 0.0
  %v440 = vmul.f32 %v438, 0.2
  %v441 = vsel %vm439, %v438, %v440
  %v442 = vsel %vm76, %v441, -1e+30
  %v443 = vsel %vm78, %v442, -inf
  %444 = vmax.xlane.f32.xlu0 %v443
  %v445 = vpop.xlane.xlu0 %444
  %v446 = vsub.f32 %v442, %v445
  %v447 = vmul.f32 %v446, 1.442695
  %v448 = vpow.pop %v447
  %v449 = vsel %vm78, %v448, 0.0
  %450 = vadd.xlane.f32.xlu0 %v449
  %v451 = vpop.xlane.xlu0 %450
  %v452 = vrcp.pop %v451
  %v453 = vmul.f32 %v448, %v452
  %v454 = vpack.c.bf16 %v453, %v453
  %455 = vst [vmem:[#allocation1] ss:$4 sm:$0xff] %v63
  %v456 = vld.sshfl [vmem:[#allocation1] sm:$0xff pattern:$0x73625140]
  %458 = vrot.lane.b32.xlu0 %v456, 72
  %v459 = vpop.permute.xlu0 %458
  %v461 = vsel %vm91, %v454, 0
  %v464 = vand.u32 %v459, %v98
  %466 = vmatpush.bf16.msra.mxu0 0
  %467 = vmatpush.bf16.msra.mxu0 0
  %468 = vmatpush.bf16.msra.mxu0 0
  %469 = vmatpush.bf16.msra.mxu0 0
  %470 = vmatpush.bf16.msra.mxu0 0
  %471 = vmatpush.bf16.msra.mxu0 0
  %472 = vmatpush.bf16.msra.mxu0 0
  %473 = vmatpush.bf16.msra.mxu0 %v464
  %474 = vmatmul.bf16.gmra.mxu0 %v461
  %v475 = vpop.f32.mrf.mxu0
  %v476 = vadd.f32 0.0, %v475
  %v477 = vpop.f32.mrf.mxu0
  %478 = vdwg.mxu0
  %vm479 = vcmp.gt.f32.partialorder %v476, 0.0
  %v480 = vmin.f32 %v476, 0.0
  %v481 = vmul.f32 %v480, 1.442695
  %v482 = vpow.pop %v481
  %v483 = vsub.f32 %v482, 1.0
  %v484 = vsel %vm479, %v476, %v483
  %486 = vrot.lane.b32.xlu0 %v172, 8
  %v487 = vpop.permute.xlu0 %486
  %490 = vrot.lane.b32.xlu0 %v224, 16
  %v491 = vpop.permute.xlu0 %490
  %494 = vrot.lane.b32.xlu0 %v276, 24
  %v495 = vpop.permute.xlu0 %494
  %498 = vrot.lane.b32.xlu0 %v328, 32
  %v499 = vpop.permute.xlu0 %498
  %502 = vrot.lane.b32.xlu0 %v380, 40
  %v503 = vpop.permute.xlu0 %502
  %506 = vrot.lane.b32.xlu0 %v432, 48
  %v507 = vpop.permute.xlu0 %506
  %510 = vrot.lane.b32.xlu0 %v484, 56
  %v511 = vpop.permute.xlu0 %510
  %vm513 = vcmask 64512
  %v514 = vsel %vm513, %v120, %v487
  %vm515 = vcmask 130048
  %v516 = vsel %vm515, %v514, %v491
  %vm517 = vcmask 195584
  %v518 = vsel %vm517, %v516, %v495
  %vm519 = vcmask 261120
  %v520 = vsel %vm519, %v518, %v499
  %vm521 = vcmask 326656
  %v522 = vsel %vm521, %v520, %v503
  %vm523 = vcmask 392192
  %v524 = vsel %vm523, %v522, %v507
  %vm525 = vcmask 457728
  %v526 = vsel %vm525, %v524, %v511
  %v527 = vpack.c.bf16 %v526, %v526
  %v528 = vld [vmem:[%s4] sm:$0xf]
  %v529 = vld [vmem:[%s4 + $0x4] sm:$0xf]
  %v530 = vld [vmem:[%s4 + $0x8] sm:$0xf]
  %v531 = vld [vmem:[%s4 + $0xc] sm:$0xf]
  %v532 = vld [vmem:[%s4 + $0x10] sm:$0xf]
  %v533 = vld [vmem:[%s4 + $0x14] sm:$0xf]
  %v534 = vld [vmem:[%s4 + $0x18] sm:$0xf]
  %v535 = vld [vmem:[%s4 + $0x1c] sm:$0xf]
  %v544 = vunpack.c.l.b16 %v528
  %v545 = vunpack.c.l.b16 %v529
  %v546 = vunpack.c.l.b16 %v530
  %v547 = vunpack.c.l.b16 %v531
  %v548 = vunpack.c.l.b16 %v532
  %v549 = vunpack.c.l.b16 %v533
  %v550 = vunpack.c.l.b16 %v534
  %v551 = vunpack.c.l.b16 %v535
  %v552 = vpack.c.b16 %v545, %v544
  %v553 = vpack.c.b16 %v547, %v546
  %v554 = vpack.c.b16 %v549, %v548
  %v555 = vpack.c.b16 %v551, %v550
  %vm560 = vcmask 523264
  %v562 = vsel %vm560, %v527, 0
  %564 = vmatpush.bf16.msra.mxu0 0
  %565 = vmatpush.bf16.msra.mxu0 0
  %566 = vmatpush.bf16.msra.mxu0 0
  %567 = vmatpush.bf16.msra.mxu0 0
  %568 = vmatpush.bf16.msra.mxu0 %v555
  %569 = vmatpush.bf16.msra.mxu0 %v554
  %570 = vmatpush.bf16.msra.mxu0 %v553
  %571 = vmatpush.bf16.msra.mxu0 %v552
  %572 = vmatmul.bf16.gmra.mxu0 %v562
  %v573 = vpop.f32.mrf.mxu0
  %v574 = vadd.f32 0.0, %v573
  %v575 = vpop.f32.mrf.mxu0
  %576 = vdwg.mxu0
  %vm577 = vcmask 43008
  %578 = vst.msk [vmem:[%s5] sm:$0x7] %vm577, %v574
  // Predicated region
  $region22: #{_gatnet_forward_impl.4} parent=0 // pred_check
    _
  $region23: #{_gatnet_forward_impl.4} parent=0 // pred_check_branch
    %580 = sbr.rel (0) target = $region25
  $region24: #{_gatnet_forward_impl.4} parent=0 // pred_region
    _
  $region25: #{_gatnet_forward_impl.4} parent=0 // pred_fallthru
    _
  // Predicated region
  $region26: #{_gatnet_forward_impl.4} parent=0 // pred_check
    _
  $region27: #{_gatnet_forward_impl.4} parent=0 // pred_check_branch
    %582 = sbr.rel (0) target = $region29
  $region28: #{_gatnet_forward_impl.4} parent=0 // pred_region
    _
  $region29: #{_gatnet_forward_impl.4} parent=0 // pred_fallthru
    _

</llo_original>
